<compile_context>
chip_gen: v7x
topology: tpu7x:2x2x1
jax: 0.10.0
libtpu: 0.0.40
codegen_flags: <defaults>
</compile_context>

<pallas_src>
import math
import jax
import jax.numpy as jnp
from jax.experimental import pallas as pl
from jax.experimental.pallas import tpu as pltpu

# model hyper-params (small, consistent with the module's forward)
B = 2          # batch
S = 8          # sequence length
D = 32         # model size ("size" arg / LayerNorm features)
NUM_HEADS = 4
D_K = D // NUM_HEADS
D_FF = 64
EPS = 1e-6

# row indices inside the packed (8, 128) operand slab
_R_BQKV, _R_B1, _R_BO, _R_G1, _R_BE1, _R_G2, _R_BE2, _R_B2 = range(8)


def encoder_layer_kernel(x_ref, mask_ref, wqkv_ref, wo_ref, w1_ref, w2_ref,
                         slab_ref, o_ref):
    # flatten (B,S,D) -> (B*S,D): leading-dim merge only (layout-trivial)
    x = x_ref[...].reshape(B * S, D)

    # packed small operands: one (8,128) f32 slab == one vreg, sliced statically
    slab = slab_ref[...]
    bqkv = slab[_R_BQKV:_R_BQKV + 1, 0:3 * D]        # (1, 96)
    b1   = slab[_R_B1:_R_B1 + 1, 0:D_FF]             # (1, 64)
    bo   = slab[_R_BO:_R_BO + 1, 0:D]                # (1, 32)
    g1   = slab[_R_G1:_R_G1 + 1, 0:D]
    be1  = slab[_R_BE1:_R_BE1 + 1, 0:D]
    g2   = slab[_R_G2:_R_G2 + 1, 0:D]
    be2  = slab[_R_BE2:_R_BE2 + 1, 0:D]
    b2   = slab[_R_B2:_R_B2 + 1, 0:D]

    def layernorm(v, g, b):
        mean = jnp.mean(v, axis=-1, keepdims=True)
        # torch.std: unbiased (divide by D-1); eps added to std (not to var)
        var = jnp.sum((v - mean) ** 2, axis=-1, keepdims=True) * (1.0 / (D - 1))
        # exact reciprocal here (propagates through the whole residual stack);
        # negligible cost at this size.
        return g * (v - mean) / (jnp.sqrt(var) + EPS) + b

    # ---- sublayer 0: pre-norm + multi-head self-attention + residual ----
    xn = layernorm(x, g1, be1)

    # fused Q|K|V projection: one (16,32)x(32,96) MXU pass, lane-dense result
    qkv = jnp.dot(xn, wqkv_ref[...],
                  preferred_element_type=jnp.float32) + bqkv        # (16, 96)
    qkv3 = qkv.reshape(B, S, 3 * D)          # sublane split only, layout-trivial

    def split_heads(off):
        # 4 lane slices (width D_K) -> stack on a new leading axis -> merge to
        # a single (H*B, S, D_K) group dim, g = h*B + b.  Only proven-cheap
        # relayout primitives (lane slice, leading stack, leading reshape).
        heads = [qkv3[:, :, off + h * D_K: off + (h + 1) * D_K]
                 for h in range(NUM_HEADS)]
        return jnp.stack(heads, axis=0).reshape(NUM_HEADS * B, S, D_K)

    qg = split_heads(0)          # (H*B, S, D_K)
    kg = split_heads(D)
    vg = split_heads(2 * D)

    scale = 1.0 / math.sqrt(D_K)
    # one batched matmul over all (head, batch) groups; the last-dim/last-dim
    # contraction implies one K relayout inside the dot (accepted per review --
    # an explicit pre-transpose costs the same XLU work here).
    s = jnp.einsum('gqd,gkd->gqk', qg, kg,
                   preferred_element_type=jnp.float32) * scale      # (H*B, S, S)
    s = s.reshape(NUM_HEADS, B, S, S)                                # leading split

    # raw mask -> additive bias (0 keep / -1e9 drop): one VPU select in-kernel
    bias = jnp.where(mask_ref[...] == 0.0,
                     jnp.float32(-1e9), jnp.float32(0.0))            # (B, 1, S)
    s = s + bias[None, :, :, :]                  # broadcast over heads and queries

    # one softmax over the whole (H,B,S,S) block
    s = s - jnp.max(s, axis=-1, keepdims=True)
    e = jnp.exp(s)
    p = e * pl.reciprocal(jnp.sum(e, axis=-1, keepdims=True), approx=True)
    p = p.reshape(NUM_HEADS * B, S, S)

    ctx = jnp.einsum('gqk,gkd->gqd', p, vg,
                     preferred_element_type=jnp.float32)             # (H*B, S, D_K)

    # fused output projection: lane-concat head outputs once, then a single
    # (16,32)x(32,32) contraction (no per-head matmul/add chain through the MRF)
    ctx_cat = jnp.concatenate(
        [ctx[h * B:(h + 1) * B] for h in range(NUM_HEADS)], axis=-1)  # (B, S, D)
    attn = jnp.dot(ctx_cat.reshape(B * S, D), wo_ref[...],
                   preferred_element_type=jnp.float32) + bo

    x1 = x + attn

    # ---- sublayer 1: pre-norm + feed-forward + residual ----
    xn2 = layernorm(x1, g2, be2)
    h1 = jnp.maximum(
        jnp.dot(xn2, w1_ref[...], preferred_element_type=jnp.float32) + b1, 0.0)
    ff = jnp.dot(h1, w2_ref[...], preferred_element_type=jnp.float32) + b2

    y = x1 + ff
    o_ref[...] = y.reshape(B, S, D).astype(o_ref.dtype)   # leading-dim split only


def pack_params(params):
    """Build-time packing: called ONCE at model construction, never per step."""
    (wq, bq, wk, bk, wv, bv, wo, bo, g1, be1, g2, be2, w1, b1, w2, b2) = params
    wqkv = jnp.concatenate([wq, wk, wv], axis=1)                     # (D, 3D)
    slab = jnp.zeros((8, 128), jnp.float32)
    slab = slab.at[_R_BQKV, :3 * D].set(jnp.concatenate([bq, bk, bv], axis=1)[0])
    slab = slab.at[_R_B1, :D_FF].set(b1[0])
    slab = slab.at[_R_BO, :D].set(bo[0])
    slab = slab.at[_R_G1, :D].set(g1[0])
    slab = slab.at[_R_BE1, :D].set(be1[0])
    slab = slab.at[_R_G2, :D].set(g2[0])
    slab = slab.at[_R_BE2, :D].set(be2[0])
    slab = slab.at[_R_B2, :D].set(b2[0])
    return dict(wqkv=wqkv, wo=wo, w1=w1, w2=w2, slab=slab)


def encoder_layer(x, mask, packed):
    """x: (B,S,D) f32; mask: (B,1,S) f32 (nonzero = keep); packed: pack_params()."""
    inputs = [x, mask, packed["wqkv"], packed["wo"], packed["w1"],
              packed["w2"], packed["slab"]]
    in_specs = [pl.BlockSpec(a.shape, lambda i, n=a.ndim: (0,) * n) for a in inputs]

    return pl.pallas_call(
        encoder_layer_kernel,
        out_shape=jax.ShapeDtypeStruct(x.shape, x.dtype),
        grid=(1,),                                   # whole problem in one grid step
        in_specs=in_specs,
        out_specs=pl.BlockSpec(x.shape, lambda i: (0, 0, 0)),
        compiler_params=pltpu.CompilerParams(
            dimension_semantics=("arbitrary",)),
        cost_estimate=pl.CostEstimate(
            flops=278528, transcendentals=608, bytes_accessed=53312),
    )(*inputs)


def reference_jax(x, mask, params):
    (wq, bq, wk, bk, wv, bv, wo, bo, g1, be1, g2, be2, w1, b1, w2, b2) = params

    def ln(v, g, b):
        mean = jnp.mean(v, axis=-1, keepdims=True)
        var = jnp.sum((v - mean) ** 2, axis=-1, keepdims=True) / (D - 1)
        return g[0] * (v - mean) / (jnp.sqrt(var) + EPS) + b[0]

    xn = ln(x, g1, be1)
    q = xn @ wq + bq[0]
    k = xn @ wk + bk[0]
    v = xn @ wv + bv[0]
    q = q.reshape(B, S, NUM_HEADS, D_K).transpose(0, 2, 1, 3)
    k = k.reshape(B, S, NUM_HEADS, D_K).transpose(0, 2, 1, 3)
    v = v.reshape(B, S, NUM_HEADS, D_K).transpose(0, 2, 1, 3)
    scores = jnp.einsum("bhqd,bhkd->bhqk", q, k) / math.sqrt(D_K)
    scores = jnp.where(mask[:, None, :, :] == 0.0, -1e9, scores)
    p = jax.nn.softmax(scores, axis=-1)
    attn = jnp.einsum("bhqk,bhkd->bhqd", p, v).transpose(0, 2, 1, 3).reshape(B, S, D)
    x1 = x + (attn @ wo + bo[0])
    xn2 = ln(x1, g2, be2)
    ff = jnp.maximum(xn2 @ w1 + b1[0], 0.0) @ w2 + b2[0]
    return x1 + ff


if __name__ == "__main__":
    key = jax.random.PRNGKey(0)
    keys = jax.random.split(key, 8)

    x = jax.random.normal(keys[0], (B, S, D), dtype=jnp.float32)
    # mask: (B, 1, S), last two key positions of batch 1 are masked out
    mask = jnp.ones((B, 1, S), dtype=jnp.float32)
    mask = mask.at[1, 0, S - 2:].set(0.0)

    def w(k, shape):
        return (0.02 * jax.random.normal(k, shape)).astype(jnp.float32)

    params = [
        w(keys[1], (D, D)), jnp.zeros((1, D), jnp.float32),     # Wq, bq
        w(keys[2], (D, D)), jnp.zeros((1, D), jnp.float32),     # Wk, bk
        w(keys[3], (D, D)), jnp.zeros((1, D), jnp.float32),     # Wv, bv
        w(keys[4], (D, D)), jnp.zeros((1, D), jnp.float32),     # Wo, bo
        jnp.ones((1, D), jnp.float32), jnp.zeros((1, D), jnp.float32),   # LN1 a2, b2
        jnp.ones((1, D), jnp.float32), jnp.zeros((1, D), jnp.float32),   # LN2 a2, b2
        w(keys[5], (D, D_FF)), jnp.zeros((1, D_FF), jnp.float32),        # FFN W1, b1
        w(keys[6], (D_FF, D)), jnp.zeros((1, D), jnp.float32),           # FFN W2, b2
    ]

    packed = jax.tree_util.tree_map(jax.block_until_ready, pack_params(params))

    out = encoder_layer(x, mask, packed)
    out = jax.block_until_ready(out)

    ref = reference_jax(x, mask, params)
    assert out.shape == (B, S, D)
    assert jnp.allclose(out, ref, rtol=1e-3, atol=1e-3), "mismatch vs JAX reference"

    print("KERNEL_OK")
</pallas_src>

<mosaic_0001>
module attributes {stable_mosaic.version = 11 : i64} {
  func.func @encoder_layer_kernel(%arg0: i32, %arg1: memref<2x8x32xf32, #tpu.memory_space<vmem>>, %arg2: memref<2x1x8xf32, #tpu.memory_space<vmem>>, %arg3: memref<32x96xf32, #tpu.memory_space<vmem>>, %arg4: memref<32x32xf32, #tpu.memory_space<vmem>>, %arg5: memref<32x64xf32, #tpu.memory_space<vmem>>, %arg6: memref<64x32xf32, #tpu.memory_space<vmem>>, %arg7: memref<8x128xf32, #tpu.memory_space<vmem>>, %arg8: memref<2x8x32xf32, #tpu.memory_space<vmem>>) attributes {dimension_semantics = [#tpu.dimension_semantics<arbitrary>], iteration_bounds = array<i64: 1>, scalar_prefetch = 0 : i64, scratch_operands = 0 : i64, tpu.core_type = #tpu.core_type<tc>, window_params = [{pipeline_mode = #tpu.pipeline_mode<synchronous>, transform_indices = @transform_0, window_bounds = array<i64: 2, 8, 32>}, {pipeline_mode = #tpu.pipeline_mode<synchronous>, transform_indices = @transform_1, window_bounds = array<i64: 2, 1, 8>}, {pipeline_mode = #tpu.pipeline_mode<synchronous>, transform_indices = @transform_2, window_bounds = array<i64: 32, 96>}, {pipeline_mode = #tpu.pipeline_mode<synchronous>, transform_indices = @transform_3, window_bounds = array<i64: 32, 32>}, {pipeline_mode = #tpu.pipeline_mode<synchronous>, transform_indices = @transform_4, window_bounds = array<i64: 32, 64>}, {pipeline_mode = #tpu.pipeline_mode<synchronous>, transform_indices = @transform_5, window_bounds = array<i64: 64, 32>}, {pipeline_mode = #tpu.pipeline_mode<synchronous>, transform_indices = @transform_6, window_bounds = array<i64: 8, 128>}, {pipeline_mode = #tpu.pipeline_mode<synchronous>, transform_indices = @transform_7, window_bounds = array<i64: 2, 8, 32>}]} {
    %c0 = arith.constant 0 : index
    %c0_0 = arith.constant 0 : index
    %c0_1 = arith.constant 0 : index
    %0 = vector.load %arg1[%c0, %c0_0, %c0_1] : memref<2x8x32xf32, #tpu.memory_space<vmem>>, vector<2x8x32xf32>
    %1 = vector.shape_cast %0 : vector<2x8x32xf32> to vector<16x32xf32>
    %c0_2 = arith.constant 0 : index
    %c0_3 = arith.constant 0 : index
    %2 = vector.load %arg7[%c0_2, %c0_3] : memref<8x128xf32, #tpu.memory_space<vmem>>, vector<8x128xf32>
    %3 = vector.extract_strided_slice %2 {offsets = [0, 0], sizes = [1, 96], strides = [1, 1]} : vector<8x128xf32> to vector<1x96xf32>
    %4 = vector.extract_strided_slice %2 {offsets = [1, 0], sizes = [1, 64], strides = [1, 1]} : vector<8x128xf32> to vector<1x64xf32>
    %5 = vector.extract_strided_slice %2 {offsets = [2, 0], sizes = [1, 32], strides = [1, 1]} : vector<8x128xf32> to vector<1x32xf32>
    %6 = vector.extract_strided_slice %2 {offsets = [3, 0], sizes = [1, 32], strides = [1, 1]} : vector<8x128xf32> to vector<1x32xf32>
    %7 = vector.extract_strided_slice %2 {offsets = [4, 0], sizes = [1, 32], strides = [1, 1]} : vector<8x128xf32> to vector<1x32xf32>
    %8 = vector.extract_strided_slice %2 {offsets = [5, 0], sizes = [1, 32], strides = [1, 1]} : vector<8x128xf32> to vector<1x32xf32>
    %9 = vector.extract_strided_slice %2 {offsets = [6, 0], sizes = [1, 32], strides = [1, 1]} : vector<8x128xf32> to vector<1x32xf32>
    %10 = vector.extract_strided_slice %2 {offsets = [7, 0], sizes = [1, 32], strides = [1, 1]} : vector<8x128xf32> to vector<1x32xf32>
    %cst = arith.constant dense<0.000000e+00> : vector<16xf32>
    %11 = vector.multi_reduction <add>, %1, %cst [1] : vector<16x32xf32> to vector<16xf32>
    %12 = vector.shape_cast %11 : vector<16xf32> to vector<16x1xf32>
    %cst_4 = arith.constant 3.200000e+01 : f32
    %13 = vector.broadcast %cst_4 : f32 to vector<16x1xf32>
    %14 = arith.divf %12, %13 : vector<16x1xf32>
    %15 = vector.broadcast %14 : vector<16x1xf32> to vector<16x32xf32>
    %16 = arith.subf %1, %15 : vector<16x32xf32>
    %17 = arith.mulf %16, %16 : vector<16x32xf32>
    %cst_5 = arith.constant dense<0.000000e+00> : vector<16xf32>
    %18 = vector.multi_reduction <add>, %17, %cst_5 [1] : vector<16x32xf32> to vector<16xf32>
    %19 = vector.shape_cast %18 : vector<16xf32> to vector<16x1xf32>
    %cst_6 = arith.constant 0.0322580636 : f32
    %20 = vector.broadcast %cst_6 : f32 to vector<16x1xf32>
    %21 = arith.mulf %19, %20 : vector<16x1xf32>
    %22 = vector.broadcast %14 : vector<16x1xf32> to vector<16x32xf32>
    %23 = arith.subf %1, %22 : vector<16x32xf32>
    %24 = vector.broadcast %6 : vector<1x32xf32> to vector<16x32xf32>
    %25 = arith.mulf %24, %23 : vector<16x32xf32>
    %26 = math.sqrt %21 : vector<16x1xf32>
    %cst_7 = arith.constant 9.99999997E-7 : f32
    %27 = vector.broadcast %cst_7 : f32 to vector<16x1xf32>
    %28 = arith.addf %26, %27 : vector<16x1xf32>
    %29 = vector.broadcast %28 : vector<16x1xf32> to vector<16x32xf32>
    %30 = arith.divf %25, %29 : vector<16x32xf32>
    %31 = vector.broadcast %7 : vector<1x32xf32> to vector<16x32xf32>
    %32 = arith.addf %30, %31 : vector<16x32xf32>
    %c0_8 = arith.constant 0 : index
    %c0_9 = arith.constant 0 : index
    %33 = vector.load %arg3[%c0_8, %c0_9] : memref<32x96xf32, #tpu.memory_space<vmem>>, vector<32x96xf32>
    %cst_10 = arith.constant dense<0.000000e+00> : vector<16x96xf32>
    %34 = tpu.matmul %32, %33, %cst_10 {dimension_numbers = #tpu.dot_dimension_numbers<[1], [0], [0], [1], [0, 0, 1, 1], [], []>} : vector<16x32xf32>, vector<32x96xf32>, vector<16x96xf32> -> vector<16x96xf32>
    %35 = vector.broadcast %3 : vector<1x96xf32> to vector<16x96xf32>
    %36 = arith.addf %34, %35 : vector<16x96xf32>
    %37 = vector.shape_cast %36 : vector<16x96xf32> to vector<2x8x96xf32>
    %38 = vector.extract_strided_slice %37 {offsets = [0, 0, 0], sizes = [2, 8, 8], strides = [1, 1, 1]} : vector<2x8x96xf32> to vector<2x8x8xf32>
    %39 = vector.extract_strided_slice %37 {offsets = [0, 0, 8], sizes = [2, 8, 8], strides = [1, 1, 1]} : vector<2x8x96xf32> to vector<2x8x8xf32>
    %40 = vector.extract_strided_slice %37 {offsets = [0, 0, 16], sizes = [2, 8, 8], strides = [1, 1, 1]} : vector<2x8x96xf32> to vector<2x8x8xf32>
    %41 = vector.extract_strided_slice %37 {offsets = [0, 0, 24], sizes = [2, 8, 8], strides = [1, 1, 1]} : vector<2x8x96xf32> to vector<2x8x8xf32>
    %42 = vector.shape_cast %38 : vector<2x8x8xf32> to vector<1x2x8x8xf32>
    %43 = vector.shape_cast %39 : vector<2x8x8xf32> to vector<1x2x8x8xf32>
    %44 = vector.shape_cast %40 : vector<2x8x8xf32> to vector<1x2x8x8xf32>
    %45 = vector.shape_cast %41 : vector<2x8x8xf32> to vector<1x2x8x8xf32>
    %46 = tpu.concatenate %42, %43, %44, %45 in 0 : vector<1x2x8x8xf32>, vector<1x2x8x8xf32>, vector<1x2x8x8xf32>, vector<1x2x8x8xf32> -> vector<4x2x8x8xf32>
    %47 = vector.shape_cast %46 : vector<4x2x8x8xf32> to vector<8x8x8xf32>
    %48 = vector.extract_strided_slice %37 {offsets = [0, 0, 32], sizes = [2, 8, 8], strides = [1, 1, 1]} : vector<2x8x96xf32> to vector<2x8x8xf32>
    %49 = vector.extract_strided_slice %37 {offsets = [0, 0, 40], sizes = [2, 8, 8], strides = [1, 1, 1]} : vector<2x8x96xf32> to vector<2x8x8xf32>
    %50 = vector.extract_strided_slice %37 {offsets = [0, 0, 48], sizes = [2, 8, 8], strides = [1, 1, 1]} : vector<2x8x96xf32> to vector<2x8x8xf32>
    %51 = vector.extract_strided_slice %37 {offsets = [0, 0, 56], sizes = [2, 8, 8], strides = [1, 1, 1]} : vector<2x8x96xf32> to vector<2x8x8xf32>
    %52 = vector.shape_cast %48 : vector<2x8x8xf32> to vector<1x2x8x8xf32>
    %53 = vector.shape_cast %49 : vector<2x8x8xf32> to vector<1x2x8x8xf32>
    %54 = vector.shape_cast %50 : vector<2x8x8xf32> to vector<1x2x8x8xf32>
    %55 = vector.shape_cast %51 : vector<2x8x8xf32> to vector<1x2x8x8xf32>
    %56 = tpu.concatenate %52, %53, %54, %55 in 0 : vector<1x2x8x8xf32>, vector<1x2x8x8xf32>, vector<1x2x8x8xf32>, vector<1x2x8x8xf32> -> vector<4x2x8x8xf32>
    %57 = vector.shape_cast %56 : vector<4x2x8x8xf32> to vector<8x8x8xf32>
    %58 = vector.extract_strided_slice %37 {offsets = [0, 0, 64], sizes = [2, 8, 8], strides = [1, 1, 1]} : vector<2x8x96xf32> to vector<2x8x8xf32>
    %59 = vector.extract_strided_slice %37 {offsets = [0, 0, 72], sizes = [2, 8, 8], strides = [1, 1, 1]} : vector<2x8x96xf32> to vector<2x8x8xf32>
    %60 = vector.extract_strided_slice %37 {offsets = [0, 0, 80], sizes = [2, 8, 8], strides = [1, 1, 1]} : vector<2x8x96xf32> to vector<2x8x8xf32>
    %61 = vector.extract_strided_slice %37 {offsets = [0, 0, 88], sizes = [2, 8, 8], strides = [1, 1, 1]} : vector<2x8x96xf32> to vector<2x8x8xf32>
    %62 = vector.shape_cast %58 : vector<2x8x8xf32> to vector<1x2x8x8xf32>
    %63 = vector.shape_cast %59 : vector<2x8x8xf32> to vector<1x2x8x8xf32>
    %64 = vector.shape_cast %60 : vector<2x8x8xf32> to vector<1x2x8x8xf32>
    %65 = vector.shape_cast %61 : vector<2x8x8xf32> to vector<1x2x8x8xf32>
    %66 = tpu.concatenate %62, %63, %64, %65 in 0 : vector<1x2x8x8xf32>, vector<1x2x8x8xf32>, vector<1x2x8x8xf32>, vector<1x2x8x8xf32> -> vector<4x2x8x8xf32>
    %67 = vector.shape_cast %66 : vector<4x2x8x8xf32> to vector<8x8x8xf32>
    "tpu.trace_start"() <{level = 10 : i32, message = "gqd,gkd->gqk"}> : () -> ()
    %cst_11 = arith.constant dense<0.000000e+00> : vector<8x8x8xf32>
    %68 = tpu.matmul %47, %57, %cst_11 {dimension_numbers = #tpu.dot_dimension_numbers<[2], [2], [1], [1], [0, 0, 0, 1, 1, 1], [0], [0]>} : vector<8x8x8xf32>, vector<8x8x8xf32>, vector<8x8x8xf32> -> vector<8x8x8xf32>
    "tpu.trace_stop"() : () -> ()
    %cst_12 = arith.constant 0.353553385 : f32
    %69 = vector.broadcast %cst_12 : f32 to vector<8x8x8xf32>
    %70 = arith.mulf %68, %69 : vector<8x8x8xf32>
    %71 = vector.shape_cast %70 : vector<8x8x8xf32> to vector<4x2x8x8xf32>
    %c0_13 = arith.constant 0 : index
    %c0_14 = arith.constant 0 : index
    %c0_15 = arith.constant 0 : index
    %72 = vector.load %arg2[%c0_13, %c0_14, %c0_15] : memref<2x1x8xf32, #tpu.memory_space<vmem>>, vector<2x1x8xf32>
    %cst_16 = arith.constant 0.000000e+00 : f32
    %73 = vector.broadcast %cst_16 : f32 to vector<2x1x8xf32>
    %74 = arith.cmpf oeq, %72, %73 : vector<2x1x8xf32>
    %cst_17 = arith.constant -1.000000e+09 : f32
    %cst_18 = arith.constant 0.000000e+00 : f32
    %75 = vector.broadcast %cst_17 : f32 to vector<2x1x8xf32>
    %76 = vector.broadcast %cst_18 : f32 to vector<2x1x8xf32>
    %77 = arith.select %74, %75, %76 : vector<2x1x8xi1>, vector<2x1x8xf32>
    %78 = vector.shape_cast %77 : vector<2x1x8xf32> to vector<1x2x1x8xf32>
    %79 = vector.broadcast %78 : vector<1x2x1x8xf32> to vector<4x2x8x8xf32>
    %80 = arith.addf %71, %79 : vector<4x2x8x8xf32>
    %cst_19 = arith.constant dense<0xFF800000> : vector<4x2x8xf32>
    %81 = vector.multi_reduction <maximumf>, %80, %cst_19 [3] : vector<4x2x8x8xf32> to vector<4x2x8xf32>
    %82 = vector.shape_cast %81 : vector<4x2x8xf32> to vector<4x2x8x1xf32>
    %83 = vector.broadcast %82 : vector<4x2x8x1xf32> to vector<4x2x8x8xf32>
    %84 = arith.subf %80, %83 : vector<4x2x8x8xf32>
    %85 = math.exp %84 : vector<4x2x8x8xf32>
    %cst_20 = arith.constant dense<0.000000e+00> : vector<4x2x8xf32>
    %86 = vector.multi_reduction <add>, %85, %cst_20 [3] : vector<4x2x8x8xf32> to vector<4x2x8xf32>
    %87 = vector.shape_cast %86 : vector<4x2x8xf32> to vector<4x2x8x1xf32>
    %88 = tpu.reciprocal %87 {approx = true} : vector<4x2x8x1xf32> -> vector<4x2x8x1xf32>
    %89 = vector.broadcast %88 : vector<4x2x8x1xf32> to vector<4x2x8x8xf32>
    %90 = arith.mulf %85, %89 : vector<4x2x8x8xf32>
    %91 = vector.shape_cast %90 : vector<4x2x8x8xf32> to vector<8x8x8xf32>
    "tpu.trace_start"() <{level = 10 : i32, message = "gqk,gkd->gqd"}> : () -> ()
    %cst_21 = arith.constant dense<0.000000e+00> : vector<8x8x8xf32>
    %92 = tpu.matmul %91, %67, %cst_21 {dimension_numbers = #tpu.dot_dimension_numbers<[2], [1], [1], [2], [0, 0, 0, 1, 1, 2], [0], [0]>} : vector<8x8x8xf32>, vector<8x8x8xf32>, vector<8x8x8xf32> -> vector<8x8x8xf32>
    "tpu.trace_stop"() : () -> ()
    %93 = vector.extract_strided_slice %92 {offsets = [0, 0, 0], sizes = [2, 8, 8], strides = [1, 1, 1]} : vector<8x8x8xf32> to vector<2x8x8xf32>
    %94 = vector.extract_strided_slice %92 {offsets = [2, 0, 0], sizes = [2, 8, 8], strides = [1, 1, 1]} : vector<8x8x8xf32> to vector<2x8x8xf32>
    %95 = vector.extract_strided_slice %92 {offsets = [4, 0, 0], sizes = [2, 8, 8], strides = [1, 1, 1]} : vector<8x8x8xf32> to vector<2x8x8xf32>
    %96 = vector.extract_strided_slice %92 {offsets = [6, 0, 0], sizes = [2, 8, 8], strides = [1, 1, 1]} : vector<8x8x8xf32> to vector<2x8x8xf32>
    %97 = tpu.concatenate %93, %94, %95, %96 in 2 : vector<2x8x8xf32>, vector<2x8x8xf32>, vector<2x8x8xf32>, vector<2x8x8xf32> -> vector<2x8x32xf32>
    %98 = vector.shape_cast %97 : vector<2x8x32xf32> to vector<16x32xf32>
    %c0_22 = arith.constant 0 : index
    %c0_23 = arith.constant 0 : index
    %99 = vector.load %arg4[%c0_22, %c0_23] : memref<32x32xf32, #tpu.memory_space<vmem>>, vector<32x32xf32>
    %cst_24 = arith.constant dense<0.000000e+00> : vector<16x32xf32>
    %100 = tpu.matmul %98, %99, %cst_24 {dimension_numbers = #tpu.dot_dimension_numbers<[1], [0], [0], [1], [0, 0, 1, 1], [], []>} : vector<16x32xf32>, vector<32x32xf32>, vector<16x32xf32> -> vector<16x32xf32>
    %101 = vector.broadcast %5 : vector<1x32xf32> to vector<16x32xf32>
    %102 = arith.addf %100, %101 : vector<16x32xf32>
    %103 = arith.addf %1, %102 : vector<16x32xf32>
    %cst_25 = arith.constant dense<0.000000e+00> : vector<16xf32>
    %104 = vector.multi_reduction <add>, %103, %cst_25 [1] : vector<16x32xf32> to vector<16xf32>
    %105 = vector.shape_cast %104 : vector<16xf32> to vector<16x1xf32>
    %cst_26 = arith.constant 3.200000e+01 : f32
    %106 = vector.broadcast %cst_26 : f32 to vector<16x1xf32>
    %107 = arith.divf %105, %106 : vector<16x1xf32>
    %108 = vector.broadcast %107 : vector<16x1xf32> to vector<16x32xf32>
    %109 = arith.subf %103, %108 : vector<16x32xf32>
    %110 = arith.mulf %109, %109 : vector<16x32xf32>
    %cst_27 = arith.constant dense<0.000000e+00> : vector<16xf32>
    %111 = vector.multi_reduction <add>, %110, %cst_27 [1] : vector<16x32xf32> to vector<16xf32>
    %112 = vector.shape_cast %111 : vector<16xf32> to vector<16x1xf32>
    %cst_28 = arith.constant 0.0322580636 : f32
    %113 = vector.broadcast %cst_28 : f32 to vector<16x1xf32>
    %114 = arith.mulf %112, %113 : vector<16x1xf32>
    %115 = vector.broadcast %107 : vector<16x1xf32> to vector<16x32xf32>
    %116 = arith.subf %103, %115 : vector<16x32xf32>
    %117 = vector.broadcast %8 : vector<1x32xf32> to vector<16x32xf32>
    %118 = arith.mulf %117, %116 : vector<16x32xf32>
    %119 = math.sqrt %114 : vector<16x1xf32>
    %cst_29 = arith.constant 9.99999997E-7 : f32
    %120 = vector.broadcast %cst_29 : f32 to vector<16x1xf32>
    %121 = arith.addf %119, %120 : vector<16x1xf32>
    %122 = vector.broadcast %121 : vector<16x1xf32> to vector<16x32xf32>
    %123 = arith.divf %118, %122 : vector<16x32xf32>
    %124 = vector.broadcast %9 : vector<1x32xf32> to vector<16x32xf32>
    %125 = arith.addf %123, %124 : vector<16x32xf32>
    %c0_30 = arith.constant 0 : index
    %c0_31 = arith.constant 0 : index
    %126 = vector.load %arg5[%c0_30, %c0_31] : memref<32x64xf32, #tpu.memory_space<vmem>>, vector<32x64xf32>
    %cst_32 = arith.constant dense<0.000000e+00> : vector<16x64xf32>
    %127 = tpu.matmul %125, %126, %cst_32 {dimension_numbers = #tpu.dot_dimension_numbers<[1], [0], [0], [1], [0, 0, 1, 1], [], []>} : vector<16x32xf32>, vector<32x64xf32>, vector<16x64xf32> -> vector<16x64xf32>
    %128 = vector.broadcast %4 : vector<1x64xf32> to vector<16x64xf32>
    %129 = arith.addf %127, %128 : vector<16x64xf32>
    %cst_33 = arith.constant 0.000000e+00 : f32
    %130 = vector.broadcast %cst_33 : f32 to vector<16x64xf32>
    %131 = arith.maximumf %129, %130 : vector<16x64xf32>
    %c0_34 = arith.constant 0 : index
    %c0_35 = arith.constant 0 : index
    %132 = vector.load %arg6[%c0_34, %c0_35] : memref<64x32xf32, #tpu.memory_space<vmem>>, vector<64x32xf32>
    %cst_36 = arith.constant dense<0.000000e+00> : vector<16x32xf32>
    %133 = tpu.matmul %131, %132, %cst_36 {dimension_numbers = #tpu.dot_dimension_numbers<[1], [0], [0], [1], [0, 0, 1, 1], [], []>} : vector<16x64xf32>, vector<64x32xf32>, vector<16x32xf32> -> vector<16x32xf32>
    %134 = vector.broadcast %10 : vector<1x32xf32> to vector<16x32xf32>
    %135 = arith.addf %133, %134 : vector<16x32xf32>
    %136 = arith.addf %103, %135 : vector<16x32xf32>
    %137 = vector.shape_cast %136 : vector<16x32xf32> to vector<2x8x32xf32>
    %c0_37 = arith.constant 0 : index
    %c0_38 = arith.constant 0 : index
    %c0_39 = arith.constant 0 : index
    %138 = vector.load %arg8[%c0_37, %c0_38, %c0_39] : memref<2x8x32xf32, #tpu.memory_space<vmem>>, vector<2x8x32xf32>
    tpu.vector_store %arg8[%c0_37, %c0_38, %c0_39], %137 {strides = array<i32>} : memref<2x8x32xf32, #tpu.memory_space<vmem>>, vector<2x8x32xf32>,
    return
  }
  func.func @transform_0(%arg0: i32) -> (i32, i32, i32) {
    %c0_i32 = arith.constant 0 : i32
    %c0_i32_0 = arith.constant 0 : i32
    %c0_i32_1 = arith.constant 0 : i32
    %c0_i32_2 = arith.constant 0 : i32
    return %c0_i32, %c0_i32_0, %c0_i32_1 : i32, i32, i32
  }
  func.func @transform_1(%arg0: i32) -> (i32, i32, i32) {
    %c0_i32 = arith.constant 0 : i32
    %c0_i32_0 = arith.constant 0 : i32
    %c0_i32_1 = arith.constant 0 : i32
    %c0_i32_2 = arith.constant 0 : i32
    return %c0_i32, %c0_i32_0, %c0_i32_1 : i32, i32, i32
  }
  func.func @transform_2(%arg0: i32) -> (i32, i32) {
    %c0_i32 = arith.constant 0 : i32
    %c0_i32_0 = arith.constant 0 : i32
    %c0_i32_1 = arith.constant 0 : i32
    return %c0_i32, %c0_i32_0 : i32, i32
  }
  func.func @transform_3(%arg0: i32) -> (i32, i32) {
    %c0_i32 = arith.constant 0 : i32
    %c0_i32_0 = arith.constant 0 : i32
    %c0_i32_1 = arith.constant 0 : i32
    return %c0_i32, %c0_i32_0 : i32, i32
  }
  func.func @transform_4(%arg0: i32) -> (i32, i32) {
    %c0_i32 = arith.constant 0 : i32
    %c0_i32_0 = arith.constant 0 : i32
    %c0_i32_1 = arith.constant 0 : i32
    return %c0_i32, %c0_i32_0 : i32, i32
  }
  func.func @transform_5(%arg0: i32) -> (i32, i32) {
    %c0_i32 = arith.constant 0 : i32
    %c0_i32_0 = arith.constant 0 : i32
    %c0_i32_1 = arith.constant 0 : i32
    return %c0_i32, %c0_i32_0 : i32, i32
  }
  func.func @transform_6(%arg0: i32) -> (i32, i32) {
    %c0_i32 = arith.constant 0 : i32
    %c0_i32_0 = arith.constant 0 : i32
    %c0_i32_1 = arith.constant 0 : i32
    return %c0_i32, %c0_i32_0 : i32, i32
  }
  func.func @transform_7(%arg0: i32) -> (i32, i32, i32) {
    %c0_i32 = arith.constant 0 : i32
    %c0_i32_0 = arith.constant 0 : i32
    %c0_i32_1 = arith.constant 0 : i32
    %c0_i32_2 = arith.constant 0 : i32
    return %c0_i32, %c0_i32_0, %c0_i32_1 : i32, i32, i32
  }
}

</mosaic_0001>

<llo_original>
// kernel: tpu_custom_call.1
$region0: #{tpu_custom_call.1}
  #allocation0 [shape = 'u32[]', space=smem, size = 0x4, offset = 0x4, fixed_abs, tag = 'smem constant byte address 0x4 - core index']
  #allocation1 [shape = 'u32[144,128]{1,0:T(1,128)}', space=vmem, size = 0x12000, scoped, tag = 'internal scratch']
  %s0 = inlined_call_operand.hbm [shape: f32[2,8,32], index: 0, kind: input, shape index: {}]
  %s1 = inlined_call_operand.vmem [shape: f32[2,1,8], index: 1, kind: input, shape index: {}]
  %s2 = inlined_call_operand.vmem [shape: f32[32,96], index: 2, kind: input, shape index: {}]
  %s3 = inlined_call_operand.vmem [shape: f32[32,32], index: 3, kind: input, shape index: {}]
  %s4 = inlined_call_operand.vmem [shape: f32[32,64], index: 4, kind: input, shape index: {}]
  %s5 = inlined_call_operand.vmem [shape: f32[64,32], index: 5, kind: input, shape index: {}]
  %s6 = inlined_call_operand.vmem [shape: f32[8,128], index: 6, kind: input, shape index: {}]
  %s7 = inlined_call_operand.hbm [shape: f32[2,8,32], index: 7, kind: output, shape index: {}]
  %s8 = sld [smem:[#allocation0]]
  $region42: #{tpu_custom_call.1} parent=0
    _
  %s10 = ssub.s32 1, %s8
  %s11 = scalar_select 0, %s10, %s8
  $region1: #{tpu_custom_call.1} parent=0
    #allocation2 [shape = 'u8[8192]{0}', space=vmem, size = 0x2000, scoped, tag = 'input window, operand 0, single buffered']
    #allocation3 [shape = 's32[1]{0}', space=sflag, size = 0x4, scoped, tag = 'scoped memory for tpu_custom_call.1']
    #allocation4 [shape = 's32[1]{0}', space=sflag, size = 0x4, scoped, tag = 'scoped memory for tpu_custom_call.1']
    #allocation5 [shape = 'u8[8192]{0}', space=vmem, size = 0x2000, scoped, tag = 'output window, operand 0, single buffered']
    %12 = vsyncpa [#allocation3], 0
    %13 = vsyncpa [#allocation4], 0
    // Predicated region
    $region2: #{tpu_custom_call.1} parent=1 // pred_check
      _
    $region3: #{tpu_custom_call.1} parent=1 // pred_check_branch
      %15 = sbr.rel (0) target = $region5
    $region4: #{tpu_custom_call.1} parent=1 // pred_region
      %s17 = ssub.s32 256, 256
      %18 = vsyncadd [#allocation3], %s17
      %s19 = sshll.u32 [#allocation2], 4
      %s20 = int_to_ptr.vmem [resolvable:$true] %s19
      %25 = dma.hbm_to_vmem [thread:$0]  %s0, 256, %s20, [#allocation3], 128, 128, 8
    $region5: #{tpu_custom_call.1} parent=1 // pred_fallthru
      _
    // Predicated region
    $region6: #{tpu_custom_call.1} parent=1 // pred_check
      _
    $region7: #{tpu_custom_call.1} parent=1 // pred_check_branch
      %27 = sbr.rel (0) target = $region9
    $region8: #{tpu_custom_call.1} parent=1 // pred_region
      _
    $region9: #{tpu_custom_call.1} parent=1 // pred_fallthru
      _
    // Predicated region
    $region10: #{tpu_custom_call.1} parent=1 // pred_check
      _
    $region11: #{tpu_custom_call.1} parent=1 // pred_check_branch
      %29 = sbr.rel (0) target = $region13
    $region12: #{tpu_custom_call.1} parent=1 // pred_region
      _
    $region13: #{tpu_custom_call.1} parent=1 // pred_fallthru
      _
    // Predicated region
    $region14: #{tpu_custom_call.1} parent=1 // pred_check
      _
    $region15: #{tpu_custom_call.1} parent=1 // pred_check_branch
      %31 = sbr.rel (0) target = $region17
    $region16: #{tpu_custom_call.1} parent=1 // pred_region
      _
    $region17: #{tpu_custom_call.1} parent=1 // pred_fallthru
      _
    // Predicated region
    $region18: #{tpu_custom_call.1} parent=1 // pred_check
      _
    $region19: #{tpu_custom_call.1} parent=1 // pred_check_branch
      %33 = sbr.rel (0) target = $region21
    $region20: #{tpu_custom_call.1} parent=1 // pred_region
      _
    $region21: #{tpu_custom_call.1} parent=1 // pred_fallthru
      _
    // Predicated region
    $region22: #{tpu_custom_call.1} parent=1 // pred_check
      _
    $region23: #{tpu_custom_call.1} parent=1 // pred_check_branch
      %35 = sbr.rel (0) target = $region25
    $region24: #{tpu_custom_call.1} parent=1 // pred_region
      _
    $region25: #{tpu_custom_call.1} parent=1 // pred_fallthru
      _
    // Predicated region
    $region26: #{tpu_custom_call.1} parent=1 // pred_check
      _
    $region27: #{tpu_custom_call.1} parent=1 // pred_check_branch
      %37 = sbr.rel (0) target = $region29
    $region28: #{tpu_custom_call.1} parent=1 // pred_region
      _
    $region29: #{tpu_custom_call.1} parent=1 // pred_fallthru
      _
    // Predicated region
    $region30: #{tpu_custom_call.1} parent=1 // pred_check
      _
    $region31: #{tpu_custom_call.1} parent=1 // pred_check_branch
      %39 = sbr.rel (0) target = $region33
    $region32: #{tpu_custom_call.1} parent=1 // pred_region
      %40 = dma.done [#allocation3], 256
    $region33: #{tpu_custom_call.1} parent=1 // pred_fallthru
      _
    %v41 = vld [vmem:[#allocation2] sm:$0xff]
    %v42 = vld [vmem:[#allocation2 + $0x8] sm:$0xff]
    %v43 = vld [vmem:[%s6] sm:$0xff]
    %vm44 = vcmask 261120
    %v45 = vsel %vm44, %v41, 0.0
    %46 = vadd.xlane.f32.xlu0 %v45
    %v47 = vpop.xlane.xlu0 %46
    %v48 = vsel %vm44, %v42, 0.0
    %49 = vadd.xlane.f32.xlu0 %v48
    %v50 = vpop.xlane.xlu0 %49
    %v51 = vrcp.pop 32.0
    %v52 = vmul.f32 %v47, %v51
    %v53 = vmul.f32 %v50, %v51
    %v54 = vsub.f32 %v41, %v52
    %v55 = vsub.f32 %v42, %v53
    %v56 = vmul.f32 %v54, %v54
    %v57 = vmul.f32 %v55, %v55
    %v58 = vsel %vm44, %v56, 0.0
    %59 = vadd.xlane.f32.xlu0 %v58
    %v60 = vpop.xlane.xlu0 %59
    %v61 = vsel %vm44, %v57, 0.0
    %62 = vadd.xlane.f32.xlu0 %v61
    %v63 = vpop.xlane.xlu0 %62
    %v64 = vmul.f32 %v60, 0.032258064
    %v65 = vmul.f32 %v63, 0.032258064
    %v66 = vlaneseq
    %v67 = vshrl.u32 %v66, 7
    %v68 = vsub.s32 3, %v67
    %v69 = vrot.slane %v43, %v68
    %v70 = vmul.f32 %v69, %v54
    %v71 = vmul.f32 %v69, %v55
    %v72 = vrsqrt.pop %v64
    %v73 = vmul.f32 %v64, %v72
    %vm74 = vcmp.eq.f32.partialorder %v64, inf
    %v75 = vsel %vm74, %v64, %v73
    %vm76 = vcmp.eq.f32.partialorder %v64, 0.0
    %v77 = vand.u32 %v64, 2147483648
    %v78 = vsel %vm76, %v77, %v75
    %v79 = vrsqrt.pop %v65
    %v80 = vmul.f32 %v65, %v79
    %vm81 = vcmp.eq.f32.partialorder %v65, inf
    %v82 = vsel %vm81, %v65, %v80
    %vm83 = vcmp.eq.f32.partialorder %v65, 0.0
    %v84 = vand.u32 %v65, 2147483648
    %v85 = vsel %vm83, %v84, %v82
    %v86 = vadd.f32 %v78, 1e-06
    %v87 = vadd.f32 %v85, 1e-06
    %v88 = vrcp.pop %v86
    %v89 = vmul.f32 %v70, %v88
    %v90 = vrcp.pop %v87
    %v91 = vmul.f32 %v71, %v90
    %v92 = vlaneseq
    %v93 = vshrl.u32 %v92, 7
    %v94 = vsub.s32 4, %v93
    %v95 = vrot.slane %v43, %v94
    %v96 = vadd.f32 %v89, %v95
    %v97 = vadd.f32 %v91, %v95
    %v98 = vld [vmem:[%s2] sm:$0xff]
    %v99 = vld [vmem:[%s2 + $0x8] sm:$0xff]
    %v100 = vld [vmem:[%s2 + $0x10] sm:$0xff]
    %v101 = vld [vmem:[%s2 + $0x18] sm:$0xff]
    %v102 = vlaneseq
    %v103 = vshrl.u32 %v102, 7
    %v104 = vsub.s32 0, %v103
    %v105 = vrot.slane %v43, %v104
    %v107 = vsel %vm44, %v96, 0
    %v110 = vsel %vm44, %v97, 0
    %112 = vmatprep.subr.mxu0 0.0
    %113 = vmatpush1.msra.mxu0 %v98
    %114 = vmatprep.subr.mxu0 0.0
    %115 = vmatpush1.msra.mxu0 %v99
    %116 = vmatprep.subr.mxu0 0.0
    %117 = vmatpush1.msra.mxu0 %v100
    %118 = vmatprep.subr.mxu0 0.0
    %119 = vmatpush1.msra.mxu0 %v101
    %120 = vmatprep.subr.mxu0 0.0
    %121 = vmatpush1.msra.mxu0 0.0
    %122 = vmatprep.subr.mxu0 0.0
    %123 = vmatpush1.msra.mxu0 0.0
    %124 = vmatprep.subr.mxu0 0.0
    %125 = vmatpush1.msra.mxu0 0.0
    %126 = vmatprep.subr.mxu0 0.0
    %127 = vmatpush1.msra.mxu0 0.0
    %128 = vmatprep.subr.mxu0 0.0
    %129 = vmatpush1.msra.mxu0 0.0
    %130 = vmatprep.subr.mxu0 0.0
    %131 = vmatpush1.msra.mxu0 0.0
    %132 = vmatprep.subr.mxu0 0.0
    %133 = vmatpush1.msra.mxu0 0.0
    %134 = vmatprep.subr.mxu0 0.0
    %135 = vmatpush1.msra.mxu0 0.0
    %136 = vmatprep.subr.mxu0 0.0
    %137 = vmatpush1.msra.mxu0 0.0
    %138 = vmatprep.subr.mxu0 0.0
    %139 = vmatpush1.msra.mxu0 0.0
    %140 = vmatprep.subr.mxu0 0.0
    %141 = vmatpush1.msra.mxu0 0.0
    %142 = vmatprep.subr.mxu0 0.0
    %143 = vmatpush1.msra.mxu0 0.0
    %144 = vmatprep.subr.mxu0 0.0
    %145 = vmatpush1.msra.mxu0 0.0
    %146 = vmatprep.subr.mxu0 0.0
    %147 = vmatpush1.msra.mxu0 0.0
    %148 = vmatprep.subr.mxu0 0.0
    %149 = vmatpush1.msra.mxu0 0.0
    %150 = vmatprep.subr.mxu0 0.0
    %151 = vmatpush1.msra.mxu0 0.0
    %152 = vmatprep.subr.mxu0 0.0
    %153 = vmatpush1.msra.mxu0 0.0
    %154 = vmatprep.subr.mxu0 0.0
    %155 = vmatpush1.msra.mxu0 0.0
    %156 = vmatprep.subr.mxu0 0.0
    %157 = vmatpush1.msra.mxu0 0.0
    %158 = vmatprep.subr.mxu0 0.0
    %159 = vmatpush1.msra.mxu0 0.0
    %160 = vmatprep.subr.mxu0 0.0
    %161 = vmatpush1.msra.mxu0 0.0
    %162 = vmatprep.subr.mxu0 0.0
    %163 = vmatpush1.msra.mxu0 0.0
    %164 = vmatprep.subr.mxu0 0.0
    %165 = vmatpush1.msra.mxu0 0.0
    %166 = vmatprep.subr.mxu0 0.0
    %167 = vmatpush1.msra.mxu0 0.0
    %168 = vmatprep.subr.mxu0 0.0
    %169 = vmatpush1.msra.mxu0 0.0
    %170 = vmatprep.subr.mxu0 0.0
    %171 = vmatpush1.msra.mxu0 0.0
    %172 = vmatprep.subr.mxu0 0.0
    %173 = vmatpush1.msra.mxu0 0.0
    %174 = vmatprep.subr.mxu0 0.0
    %175 = vmatpush1.msra.mxu0 0.0
    %176 = vmatprep.mubr.f32.mxu0 0.0
    %177 = vmatmul.mubr.f32.gmra.mrb[0].mxu0 %v107
    %v178 = vpop.f32.mrb[0].mxu0
    %v179 = vadd.f32 %v105, %v178
    %v180 = vpop.f32.mrb[0].mxu0
    %181 = vmatprep.mubr.f32.mxu0 0.0
    %182 = vmatmul.mubr.f32.gmra.mrb[0].mxu0 %v110
    %v183 = vpop.f32.mrb[0].mxu0
    %v184 = vadd.f32 %v105, %v183
    %v185 = vpop.f32.mrb[0].mxu0
    %186 = vdwg.mxu0
    %189 = vrot.lane.b32.xlu0 %v179, 120
    %v190 = vpop.permute.xlu0 %189
    %191 = vrot.lane.b32.xlu0 %v184, 120
    %v192 = vpop.permute.xlu0 %191
    %193 = vrot.lane.b32.xlu0 %v179, 112
    %v194 = vpop.permute.xlu0 %193
    %195 = vrot.lane.b32.xlu0 %v184, 112
    %v196 = vpop.permute.xlu0 %195
    %197 = vrot.lane.b32.xlu0 %v179, 104
    %v198 = vpop.permute.xlu0 %197
    %199 = vrot.lane.b32.xlu0 %v184, 104
    %v200 = vpop.permute.xlu0 %199
    %201 = vrot.lane.b32.xlu0 %v179, 96
    %v202 = vpop.permute.xlu0 %201
    %vm203 = vcmask 64512
    %v204 = vsel %vm203, %v179, 0
    %v206 = vsel %vm203, %v202, 0
    %208 = vmatprep.subr.mxu0 0.0
    %209 = vmatpush1.xpose.msra.mxu0 %v206
    %210 = vmatprep.subr.mxu0 0.0
    %211 = vmatpush1.xpose.msra.mxu0 0.0
    %212 = vmatprep.subr.mxu0 0.0
    %213 = vmatpush1.xpose.msra.mxu0 0.0
    %214 = vmatprep.subr.mxu0 0.0
    %215 = vmatpush1.xpose.msra.mxu0 0.0
    %216 = vmatprep.subr.mxu0 0.0
    %217 = vmatpush1.xpose.msra.mxu0 0.0
    %218 = vmatprep.subr.mxu0 0.0
    %219 = vmatpush1.xpose.msra.mxu0 0.0
    %220 = vmatprep.subr.mxu0 0.0
    %221 = vmatpush1.xpose.msra.mxu0 0.0
    %222 = vmatprep.subr.mxu0 0.0
    %223 = vmatpush1.xpose.msra.mxu0 0.0
    %224 = vmatprep.subr.mxu0 0.0
    %225 = vmatpush1.xpose.msra.mxu0 0.0
    %226 = vmatprep.subr.mxu0 0.0
    %227 = vmatpush1.xpose.msra.mxu0 0.0
    %228 = vmatprep.subr.mxu0 0.0
    %229 = vmatpush1.xpose.msra.mxu0 0.0
    %230 = vmatprep.subr.mxu0 0.0
    %231 = vmatpush1.xpose.msra.mxu0 0.0
    %232 = vmatprep.subr.mxu0 0.0
    %233 = vmatpush1.xpose.msra.mxu0 0.0
    %234 = vmatprep.subr.mxu0 0.0
    %235 = vmatpush1.xpose.msra.mxu0 0.0
    %236 = vmatprep.subr.mxu0 0.0
    %237 = vmatpush1.xpose.msra.mxu0 0.0
    %238 = vmatprep.subr.mxu0 0.0
    %239 = vmatpush1.xpose.msra.mxu0 0.0
    %240 = vmatprep.subr.mxu0 0.0
    %241 = vmatpush1.xpose.msra.mxu0 0.0
    %242 = vmatprep.subr.mxu0 0.0
    %243 = vmatpush1.xpose.msra.mxu0 0.0
    %244 = vmatprep.subr.mxu0 0.0
    %245 = vmatpush1.xpose.msra.mxu0 0.0
    %246 = vmatprep.subr.mxu0 0.0
    %247 = vmatpush1.xpose.msra.mxu0 0.0
    %248 = vmatprep.subr.mxu0 0.0
    %249 = vmatpush1.xpose.msra.mxu0 0.0
    %250 = vmatprep.subr.mxu0 0.0
    %251 = vmatpush1.xpose.msra.mxu0 0.0
    %252 = vmatprep.subr.mxu0 0.0
    %253 = vmatpush1.xpose.msra.mxu0 0.0
    %254 = vmatprep.subr.mxu0 0.0
    %255 = vmatpush1.xpose.msra.mxu0 0.0
    %256 = vmatprep.subr.mxu0 0.0
    %257 = vmatpush1.xpose.msra.mxu0 0.0
    %258 = vmatprep.subr.mxu0 0.0
    %259 = vmatpush1.xpose.msra.mxu0 0.0
    %260 = vmatprep.subr.mxu0 0.0
    %261 = vmatpush1.xpose.msra.mxu0 0.0
    %262 = vmatprep.subr.mxu0 0.0
    %263 = vmatpush1.xpose.msra.mxu0 0.0
    %264 = vmatprep.subr.mxu0 0.0
    %265 = vmatpush1.xpose.msra.mxu0 0.0
    %266 = vmatprep.subr.mxu0 0.0
    %267 = vmatpush1.xpose.msra.mxu0 0.0
    %268 = vmatprep.subr.mxu0 0.0
    %269 = vmatpush1.xpose.msra.mxu0 0.0
    %270 = vmatprep.subr.mxu0 0.0
    %271 = vmatpush1.xpose.msra.mxu0 0.0
    %272 = vmatprep.mubr.f32.mxu0 0.0
    %273 = vmatmul.mubr.f32.gmra.mrb[0].mxu0 %v204
    %v274 = vpop.f32.mrb[0].mxu0
    %v275 = vadd.f32 0.0, %v274
    %v276 = vpop.f32.mrb[0].mxu0
    %277 = vdwg.mxu0
    %278 = vrot.lane.b32.xlu0 %v184, 96
    %v279 = vpop.permute.xlu0 %278
    %v280 = vsel %vm203, %v184, 0
    %v282 = vsel %vm203, %v279, 0
    %284 = vmatprep.subr.mxu0 0.0
    %285 = vmatpush1.xpose.msra.mxu0 %v282
    %286 = vmatprep.subr.mxu0 0.0
    %287 = vmatpush1.xpose.msra.mxu0 0.0
    %288 = vmatprep.subr.mxu0 0.0
    %289 = vmatpush1.xpose.msra.mxu0 0.0
    %290 = vmatprep.subr.mxu0 0.0
    %291 = vmatpush1.xpose.msra.mxu0 0.0
    %292 = vmatprep.subr.mxu0 0.0
    %293 = vmatpush1.xpose.msra.mxu0 0.0
    %294 = vmatprep.subr.mxu0 0.0
    %295 = vmatpush1.xpose.msra.mxu0 0.0
    %296 = vmatprep.subr.mxu0 0.0
    %297 = vmatpush1.xpose.msra.mxu0 0.0
    %298 = vmatprep.subr.mxu0 0.0
    %299 = vmatpush1.xpose.msra.mxu0 0.0
    %300 = vmatprep.subr.mxu0 0.0
    %301 = vmatpush1.xpose.msra.mxu0 0.0
    %302 = vmatprep.subr.mxu0 0.0
    %303 = vmatpush1.xpose.msra.mxu0 0.0
    %304 = vmatprep.subr.mxu0 0.0
    %305 = vmatpush1.xpose.msra.mxu0 0.0
    %306 = vmatprep.subr.mxu0 0.0
    %307 = vmatpush1.xpose.msra.mxu0 0.0
    %308 = vmatprep.subr.mxu0 0.0
    %309 = vmatpush1.xpose.msra.mxu0 0.0
    %310 = vmatprep.subr.mxu0 0.0
    %311 = vmatpush1.xpose.msra.mxu0 0.0
    %312 = vmatprep.subr.mxu0 0.0
    %313 = vmatpush1.xpose.msra.mxu0 0.0
    %314 = vmatprep.subr.mxu0 0.0
    %315 = vmatpush1.xpose.msra.mxu0 0.0
    %316 = vmatprep.subr.mxu0 0.0
    %317 = vmatpush1.xpose.msra.mxu0 0.0
    %318 = vmatprep.subr.mxu0 0.0
    %319 = vmatpush1.xpose.msra.mxu0 0.0
    %320 = vmatprep.subr.mxu0 0.0
    %321 = vmatpush1.xpose.msra.mxu0 0.0
    %322 = vmatprep.subr.mxu0 0.0
    %323 = vmatpush1.xpose.msra.mxu0 0.0
    %324 = vmatprep.subr.mxu0 0.0
    %325 = vmatpush1.xpose.msra.mxu0 0.0
    %326 = vmatprep.subr.mxu0 0.0
    %327 = vmatpush1.xpose.msra.mxu0 0.0
    %328 = vmatprep.subr.mxu0 0.0
    %329 = vmatpush1.xpose.msra.mxu0 0.0
    %330 = vmatprep.subr.mxu0 0.0
    %331 = vmatpush1.xpose.msra.mxu0 0.0
    %332 = vmatprep.subr.mxu0 0.0
    %333 = vmatpush1.xpose.msra.mxu0 0.0
    %334 = vmatprep.subr.mxu0 0.0
    %335 = vmatpush1.xpose.msra.mxu0 0.0
    %336 = vmatprep.subr.mxu0 0.0
    %337 = vmatpush1.xpose.msra.mxu0 0.0
    %338 = vmatprep.subr.mxu0 0.0
    %339 = vmatpush1.xpose.msra.mxu0 0.0
    %340 = vmatprep.subr.mxu0 0.0
    %341 = vmatpush1.xpose.msra.mxu0 0.0
    %342 = vmatprep.subr.mxu0 0.0
    %343 = vmatpush1.xpose.msra.mxu0 0.0
    %344 = vmatprep.subr.mxu0 0.0
    %345 = vmatpush1.xpose.msra.mxu0 0.0
    %346 = vmatprep.subr.mxu0 0.0
    %347 = vmatpush1.xpose.msra.mxu0 0.0
    %348 = vmatprep.mubr.f32.mxu0 0.0
    %349 = vmatmul.mubr.f32.gmra.mrb[0].mxu0 %v280
    %v350 = vpop.f32.mrb[0].mxu0
    %v351 = vadd.f32 0.0, %v350
    %v352 = vpop.f32.mrb[0].mxu0
    %353 = vdwg.mxu0
    %354 = vrot.lane.b32.xlu0 %v190, 96
    %v355 = vpop.permute.xlu0 %354
    %v356 = vsel %vm203, %v190, 0
    %v358 = vsel %vm203, %v355, 0
    %360 = vmatprep.subr.mxu0 0.0
    %361 = vmatpush1.xpose.msra.mxu0 %v358
    %362 = vmatprep.subr.mxu0 0.0
    %363 = vmatpush1.xpose.msra.mxu0 0.0
    %364 = vmatprep.subr.mxu0 0.0
    %365 = vmatpush1.xpose.msra.mxu0 0.0
    %366 = vmatprep.subr.mxu0 0.0
    %367 = vmatpush1.xpose.msra.mxu0 0.0
    %368 = vmatprep.subr.mxu0 0.0
    %369 = vmatpush1.xpose.msra.mxu0 0.0
    %370 = vmatprep.subr.mxu0 0.0
    %371 = vmatpush1.xpose.msra.mxu0 0.0
    %372 = vmatprep.subr.mxu0 0.0
    %373 = vmatpush1.xpose.msra.mxu0 0.0
    %374 = vmatprep.subr.mxu0 0.0
    %375 = vmatpush1.xpose.msra.mxu0 0.0
    %376 = vmatprep.subr.mxu0 0.0
    %377 = vmatpush1.xpose.msra.mxu0 0.0
    %378 = vmatprep.subr.mxu0 0.0
    %379 = vmatpush1.xpose.msra.mxu0 0.0
    %380 = vmatprep.subr.mxu0 0.0
    %381 = vmatpush1.xpose.msra.mxu0 0.0
    %382 = vmatprep.subr.mxu0 0.0
    %383 = vmatpush1.xpose.msra.mxu0 0.0
    %384 = vmatprep.subr.mxu0 0.0
    %385 = vmatpush1.xpose.msra.mxu0 0.0
    %386 = vmatprep.subr.mxu0 0.0
    %387 = vmatpush1.xpose.msra.mxu0 0.0
    %388 = vmatprep.subr.mxu0 0.0
    %389 = vmatpush1.xpose.msra.mxu0 0.0
    %390 = vmatprep.subr.mxu0 0.0
    %391 = vmatpush1.xpose.msra.mxu0 0.0
    %392 = vmatprep.subr.mxu0 0.0
    %393 = vmatpush1.xpose.msra.mxu0 0.0
    %394 = vmatprep.subr.mxu0 0.0
    %395 = vmatpush1.xpose.msra.mxu0 0.0
    %396 = vmatprep.subr.mxu0 0.0
    %397 = vmatpush1.xpose.msra.mxu0 0.0
    %398 = vmatprep.subr.mxu0 0.0
    %399 = vmatpush1.xpose.msra.mxu0 0.0
    %400 = vmatprep.subr.mxu0 0.0
    %401 = vmatpush1.xpose.msra.mxu0 0.0
    %402 = vmatprep.subr.mxu0 0.0
    %403 = vmatpush1.xpose.msra.mxu0 0.0
    %404 = vmatprep.subr.mxu0 0.0
    %405 = vmatpush1.xpose.msra.mxu0 0.0
    %406 = vmatprep.subr.mxu0 0.0
    %407 = vmatpush1.xpose.msra.mxu0 0.0
    %408 = vmatprep.subr.mxu0 0.0
    %409 = vmatpush1.xpose.msra.mxu0 0.0
    %410 = vmatprep.subr.mxu0 0.0
    %411 = vmatpush1.xpose.msra.mxu0 0.0
    %412 = vmatprep.subr.mxu0 0.0
    %413 = vmatpush1.xpose.msra.mxu0 0.0
    %414 = vmatprep.subr.mxu0 0.0
    %415 = vmatpush1.xpose.msra.mxu0 0.0
    %416 = vmatprep.subr.mxu0 0.0
    %417 = vmatpush1.xpose.msra.mxu0 0.0
    %418 = vmatprep.subr.mxu0 0.0
    %419 = vmatpush1.xpose.msra.mxu0 0.0
    %420 = vmatprep.subr.mxu0 0.0
    %421 = vmatpush1.xpose.msra.mxu0 0.0
    %422 = vmatprep.subr.mxu0 0.0
    %423 = vmatpush1.xpose.msra.mxu0 0.0
    %424 = vmatprep.mubr.f32.mxu0 0.0
    %425 = vmatmul.mubr.f32.gmra.mrb[0].mxu0 %v356
    %v426 = vpop.f32.mrb[0].mxu0
    %v427 = vadd.f32 0.0, %v426
    %v428 = vpop.f32.mrb[0].mxu0
    %429 = vdwg.mxu0
    %430 = vrot.lane.b32.xlu0 %v192, 96
    %v431 = vpop.permute.xlu0 %430
    %v432 = vsel %vm203, %v192, 0
    %v434 = vsel %vm203, %v431, 0
    %436 = vmatprep.subr.mxu0 0.0
    %437 = vmatpush1.xpose.msra.mxu0 %v434
    %438 = vmatprep.subr.mxu0 0.0
    %439 = vmatpush1.xpose.msra.mxu0 0.0
    %440 = vmatprep.subr.mxu0 0.0
    %441 = vmatpush1.xpose.msra.mxu0 0.0
    %442 = vmatprep.subr.mxu0 0.0
    %443 = vmatpush1.xpose.msra.mxu0 0.0
    %444 = vmatprep.subr.mxu0 0.0
    %445 = vmatpush1.xpose.msra.mxu0 0.0
    %446 = vmatprep.subr.mxu0 0.0
    %447 = vmatpush1.xpose.msra.mxu0 0.0
    %448 = vmatprep.subr.mxu0 0.0
    %449 = vmatpush1.xpose.msra.mxu0 0.0
    %450 = vmatprep.subr.mxu0 0.0
    %451 = vmatpush1.xpose.msra.mxu0 0.0
    %452 = vmatprep.subr.mxu0 0.0
    %453 = vmatpush1.xpose.msra.mxu0 0.0
    %454 = vmatprep.subr.mxu0 0.0
    %455 = vmatpush1.xpose.msra.mxu0 0.0
    %456 = vmatprep.subr.mxu0 0.0
    %457 = vmatpush1.xpose.msra.mxu0 0.0
    %458 = vmatprep.subr.mxu0 0.0
    %459 = vmatpush1.xpose.msra.mxu0 0.0
    %460 = vmatprep.subr.mxu0 0.0
    %461 = vmatpush1.xpose.msra.mxu0 0.0
    %462 = vmatprep.subr.mxu0 0.0
    %463 = vmatpush1.xpose.msra.mxu0 0.0
    %464 = vmatprep.subr.mxu0 0.0
    %465 = vmatpush1.xpose.msra.mxu0 0.0
    %466 = vmatprep.subr.mxu0 0.0
    %467 = vmatpush1.xpose.msra.mxu0 0.0
    %468 = vmatprep.subr.mxu0 0.0
    %469 = vmatpush1.xpose.msra.mxu0 0.0
    %470 = vmatprep.subr.mxu0 0.0
    %471 = vmatpush1.xpose.msra.mxu0 0.0
    %472 = vmatprep.subr.mxu0 0.0
    %473 = vmatpush1.xpose.msra.mxu0 0.0
    %474 = vmatprep.subr.mxu0 0.0
    %475 = vmatpush1.xpose.msra.mxu0 0.0
    %476 = vmatprep.subr.mxu0 0.0
    %477 = vmatpush1.xpose.msra.mxu0 0.0
    %478 = vmatprep.subr.mxu0 0.0
    %479 = vmatpush1.xpose.msra.mxu0 0.0
    %480 = vmatprep.subr.mxu0 0.0
    %481 = vmatpush1.xpose.msra.mxu0 0.0
    %482 = vmatprep.subr.mxu0 0.0
    %483 = vmatpush1.xpose.msra.mxu0 0.0
    %484 = vmatprep.subr.mxu0 0.0
    %485 = vmatpush1.xpose.msra.mxu0 0.0
    %486 = vmatprep.subr.mxu0 0.0
    %487 = vmatpush1.xpose.msra.mxu0 0.0
    %488 = vmatprep.subr.mxu0 0.0
    %489 = vmatpush1.xpose.msra.mxu0 0.0
    %490 = vmatprep.subr.mxu0 0.0
    %491 = vmatpush1.xpose.msra.mxu0 0.0
    %492 = vmatprep.subr.mxu0 0.0
    %493 = vmatpush1.xpose.msra.mxu0 0.0
    %494 = vmatprep.subr.mxu0 0.0
    %495 = vmatpush1.xpose.msra.mxu0 0.0
    %496 = vmatprep.subr.mxu0 0.0
    %497 = vmatpush1.xpose.msra.mxu0 0.0
    %498 = vmatprep.subr.mxu0 0.0
    %499 = vmatpush1.xpose.msra.mxu0 0.0
    %500 = vmatprep.mubr.f32.mxu0 0.0
    %501 = vmatmul.mubr.f32.gmra.mrb[0].mxu0 %v432
    %v502 = vpop.f32.mrb[0].mxu0
    %v503 = vadd.f32 0.0, %v502
    %v504 = vpop.f32.mrb[0].mxu0
    %505 = vdwg.mxu0
    %506 = vrot.lane.b32.xlu0 %v194, 96
    %v507 = vpop.permute.xlu0 %506
    %v508 = vsel %vm203, %v194, 0
    %v510 = vsel %vm203, %v507, 0
    %512 = vmatprep.subr.mxu0 0.0
    %513 = vmatpush1.xpose.msra.mxu0 %v510
    %514 = vmatprep.subr.mxu0 0.0
    %515 = vmatpush1.xpose.msra.mxu0 0.0
    %516 = vmatprep.subr.mxu0 0.0
    %517 = vmatpush1.xpose.msra.mxu0 0.0
    %518 = vmatprep.subr.mxu0 0.0
    %519 = vmatpush1.xpose.msra.mxu0 0.0
    %520 = vmatprep.subr.mxu0 0.0
    %521 = vmatpush1.xpose.msra.mxu0 0.0
    %522 = vmatprep.subr.mxu0 0.0
    %523 = vmatpush1.xpose.msra.mxu0 0.0
    %524 = vmatprep.subr.mxu0 0.0
    %525 = vmatpush1.xpose.msra.mxu0 0.0
    %526 = vmatprep.subr.mxu0 0.0
    %527 = vmatpush1.xpose.msra.mxu0 0.0
    %528 = vmatprep.subr.mxu0 0.0
    %529 = vmatpush1.xpose.msra.mxu0 0.0
    %530 = vmatprep.subr.mxu0 0.0
    %531 = vmatpush1.xpose.msra.mxu0 0.0
    %532 = vmatprep.subr.mxu0 0.0
    %533 = vmatpush1.xpose.msra.mxu0 0.0
    %534 = vmatprep.subr.mxu0 0.0
    %535 = vmatpush1.xpose.msra.mxu0 0.0
    %536 = vmatprep.subr.mxu0 0.0
    %537 = vmatpush1.xpose.msra.mxu0 0.0
    %538 = vmatprep.subr.mxu0 0.0
    %539 = vmatpush1.xpose.msra.mxu0 0.0
    %540 = vmatprep.subr.mxu0 0.0
    %541 = vmatpush1.xpose.msra.mxu0 0.0
    %542 = vmatprep.subr.mxu0 0.0
    %543 = vmatpush1.xpose.msra.mxu0 0.0
    %544 = vmatprep.subr.mxu0 0.0
    %545 = vmatpush1.xpose.msra.mxu0 0.0
    %546 = vmatprep.subr.mxu0 0.0
    %547 = vmatpush1.xpose.msra.mxu0 0.0
    %548 = vmatprep.subr.mxu0 0.0
    %549 = vmatpush1.xpose.msra.mxu0 0.0
    %550 = vmatprep.subr.mxu0 0.0
    %551 = vmatpush1.xpose.msra.mxu0 0.0
    %552 = vmatprep.subr.mxu0 0.0
    %553 = vmatpush1.xpose.msra.mxu0 0.0
    %554 = vmatprep.subr.mxu0 0.0
    %555 = vmatpush1.xpose.msra.mxu0 0.0
    %556 = vmatprep.subr.mxu0 0.0
    %557 = vmatpush1.xpose.msra.mxu0 0.0
    %558 = vmatprep.subr.mxu0 0.0
    %559 = vmatpush1.xpose.msra.mxu0 0.0
    %560 = vmatprep.subr.mxu0 0.0
    %561 = vmatpush1.xpose.msra.mxu0 0.0
    %562 = vmatprep.subr.mxu0 0.0
    %563 = vmatpush1.xpose.msra.mxu0 0.0
    %564 = vmatprep.subr.mxu0 0.0
    %565 = vmatpush1.xpose.msra.mxu0 0.0
    %566 = vmatprep.subr.mxu0 0.0
    %567 = vmatpush1.xpose.msra.mxu0 0.0
    %568 = vmatprep.subr.mxu0 0.0
    %569 = vmatpush1.xpose.msra.mxu0 0.0
    %570 = vmatprep.subr.mxu0 0.0
    %571 = vmatpush1.xpose.msra.mxu0 0.0
    %572 = vmatprep.subr.mxu0 0.0
    %573 = vmatpush1.xpose.msra.mxu0 0.0
    %574 = vmatprep.subr.mxu0 0.0
    %575 = vmatpush1.xpose.msra.mxu0 0.0
    %576 = vmatprep.mubr.f32.mxu0 0.0
    %577 = vmatmul.mubr.f32.gmra.mrb[0].mxu0 %v508
    %v578 = vpop.f32.mrb[0].mxu0
    %v579 = vadd.f32 0.0, %v578
    %v580 = vpop.f32.mrb[0].mxu0
    %581 = vdwg.mxu0
    %582 = vrot.lane.b32.xlu0 %v196, 96
    %v583 = vpop.permute.xlu0 %582
    %v584 = vsel %vm203, %v196, 0
    %v586 = vsel %vm203, %v583, 0
    %588 = vmatprep.subr.mxu0 0.0
    %589 = vmatpush1.xpose.msra.mxu0 %v586
    %590 = vmatprep.subr.mxu0 0.0
    %591 = vmatpush1.xpose.msra.mxu0 0.0
    %592 = vmatprep.subr.mxu0 0.0
    %593 = vmatpush1.xpose.msra.mxu0 0.0
    %594 = vmatprep.subr.mxu0 0.0
    %595 = vmatpush1.xpose.msra.mxu0 0.0
    %596 = vmatprep.subr.mxu0 0.0
    %597 = vmatpush1.xpose.msra.mxu0 0.0
    %598 = vmatprep.subr.mxu0 0.0
    %599 = vmatpush1.xpose.msra.mxu0 0.0
    %600 = vmatprep.subr.mxu0 0.0
    %601 = vmatpush1.xpose.msra.mxu0 0.0
    %602 = vmatprep.subr.mxu0 0.0
    %603 = vmatpush1.xpose.msra.mxu0 0.0
    %604 = vmatprep.subr.mxu0 0.0
    %605 = vmatpush1.xpose.msra.mxu0 0.0
    %606 = vmatprep.subr.mxu0 0.0
    %607 = vmatpush1.xpose.msra.mxu0 0.0
    %608 = vmatprep.subr.mxu0 0.0
    %609 = vmatpush1.xpose.msra.mxu0 0.0
    %610 = vmatprep.subr.mxu0 0.0
    %611 = vmatpush1.xpose.msra.mxu0 0.0
    %612 = vmatprep.subr.mxu0 0.0
    %613 = vmatpush1.xpose.msra.mxu0 0.0
    %614 = vmatprep.subr.mxu0 0.0
    %615 = vmatpush1.xpose.msra.mxu0 0.0
    %616 = vmatprep.subr.mxu0 0.0
    %617 = vmatpush1.xpose.msra.mxu0 0.0
    %618 = vmatprep.subr.mxu0 0.0
    %619 = vmatpush1.xpose.msra.mxu0 0.0
    %620 = vmatprep.subr.mxu0 0.0
    %621 = vmatpush1.xpose.msra.mxu0 0.0
    %622 = vmatprep.subr.mxu0 0.0
    %623 = vmatpush1.xpose.msra.mxu0 0.0
    %624 = vmatprep.subr.mxu0 0.0
    %625 = vmatpush1.xpose.msra.mxu0 0.0
    %626 = vmatprep.subr.mxu0 0.0
    %627 = vmatpush1.xpose.msra.mxu0 0.0
    %628 = vmatprep.subr.mxu0 0.0
    %629 = vmatpush1.xpose.msra.mxu0 0.0
    %630 = vmatprep.subr.mxu0 0.0
    %631 = vmatpush1.xpose.msra.mxu0 0.0
    %632 = vmatprep.subr.mxu0 0.0
    %633 = vmatpush1.xpose.msra.mxu0 0.0
    %634 = vmatprep.subr.mxu0 0.0
    %635 = vmatpush1.xpose.msra.mxu0 0.0
    %636 = vmatprep.subr.mxu0 0.0
    %637 = vmatpush1.xpose.msra.mxu0 0.0
    %638 = vmatprep.subr.mxu0 0.0
    %639 = vmatpush1.xpose.msra.mxu0 0.0
    %640 = vmatprep.subr.mxu0 0.0
    %641 = vmatpush1.xpose.msra.mxu0 0.0
    %642 = vmatprep.subr.mxu0 0.0
    %643 = vmatpush1.xpose.msra.mxu0 0.0
    %644 = vmatprep.subr.mxu0 0.0
    %645 = vmatpush1.xpose.msra.mxu0 0.0
    %646 = vmatprep.subr.mxu0 0.0
    %647 = vmatpush1.xpose.msra.mxu0 0.0
    %648 = vmatprep.subr.mxu0 0.0
    %649 = vmatpush1.xpose.msra.mxu0 0.0
    %650 = vmatprep.subr.mxu0 0.0
    %651 = vmatpush1.xpose.msra.mxu0 0.0
    %652 = vmatprep.mubr.f32.mxu0 0.0
    %653 = vmatmul.mubr.f32.gmra.mrb[0].mxu0 %v584
    %v654 = vpop.f32.mrb[0].mxu0
    %v655 = vadd.f32 0.0, %v654
    %v656 = vpop.f32.mrb[0].mxu0
    %657 = vdwg.mxu0
    %658 = vrot.lane.b32.xlu0 %v198, 96
    %v659 = vpop.permute.xlu0 %658
    %v660 = vsel %vm203, %v198, 0
    %v662 = vsel %vm203, %v659, 0
    %664 = vmatprep.subr.mxu0 0.0
    %665 = vmatpush1.xpose.msra.mxu0 %v662
    %666 = vmatprep.subr.mxu0 0.0
    %667 = vmatpush1.xpose.msra.mxu0 0.0
    %668 = vmatprep.subr.mxu0 0.0
    %669 = vmatpush1.xpose.msra.mxu0 0.0
    %670 = vmatprep.subr.mxu0 0.0
    %671 = vmatpush1.xpose.msra.mxu0 0.0
    %672 = vmatprep.subr.mxu0 0.0
    %673 = vmatpush1.xpose.msra.mxu0 0.0
    %674 = vmatprep.subr.mxu0 0.0
    %675 = vmatpush1.xpose.msra.mxu0 0.0
    %676 = vmatprep.subr.mxu0 0.0
    %677 = vmatpush1.xpose.msra.mxu0 0.0
    %678 = vmatprep.subr.mxu0 0.0
    %679 = vmatpush1.xpose.msra.mxu0 0.0
    %680 = vmatprep.subr.mxu0 0.0
    %681 = vmatpush1.xpose.msra.mxu0 0.0
    %682 = vmatprep.subr.mxu0 0.0
    %683 = vmatpush1.xpose.msra.mxu0 0.0
    %684 = vmatprep.subr.mxu0 0.0
    %685 = vmatpush1.xpose.msra.mxu0 0.0
    %686 = vmatprep.subr.mxu0 0.0
    %687 = vmatpush1.xpose.msra.mxu0 0.0
    %688 = vmatprep.subr.mxu0 0.0
    %689 = vmatpush1.xpose.msra.mxu0 0.0
    %690 = vmatprep.subr.mxu0 0.0
    %691 = vmatpush1.xpose.msra.mxu0 0.0
    %692 = vmatprep.subr.mxu0 0.0
    %693 = vmatpush1.xpose.msra.mxu0 0.0
    %694 = vmatprep.subr.mxu0 0.0
    %695 = vmatpush1.xpose.msra.mxu0 0.0
    %696 = vmatprep.subr.mxu0 0.0
    %697 = vmatpush1.xpose.msra.mxu0 0.0
    %698 = vmatprep.subr.mxu0 0.0
    %699 = vmatpush1.xpose.msra.mxu0 0.0
    %700 = vmatprep.subr.mxu0 0.0
    %701 = vmatpush1.xpose.msra.mxu0 0.0
    %702 = vmatprep.subr.mxu0 0.0
    %703 = vmatpush1.xpose.msra.mxu0 0.0
    %704 = vmatprep.subr.mxu0 0.0
    %705 = vmatpush1.xpose.msra.mxu0 0.0
    %706 = vmatprep.subr.mxu0 0.0
    %707 = vmatpush1.xpose.msra.mxu0 0.0
    %708 = vmatprep.subr.mxu0 0.0
    %709 = vmatpush1.xpose.msra.mxu0 0.0
    %710 = vmatprep.subr.mxu0 0.0
    %711 = vmatpush1.xpose.msra.mxu0 0.0
    %712 = vmatprep.subr.mxu0 0.0
    %713 = vmatpush1.xpose.msra.mxu0 0.0
    %714 = vmatprep.subr.mxu0 0.0
    %715 = vmatpush1.xpose.msra.mxu0 0.0
    %716 = vmatprep.subr.mxu0 0.0
    %717 = vmatpush1.xpose.msra.mxu0 0.0
    %718 = vmatprep.subr.mxu0 0.0
    %719 = vmatpush1.xpose.msra.mxu0 0.0
    %720 = vmatprep.subr.mxu0 0.0
    %721 = vmatpush1.xpose.msra.mxu0 0.0
    %722 = vmatprep.subr.mxu0 0.0
    %723 = vmatpush1.xpose.msra.mxu0 0.0
    %724 = vmatprep.subr.mxu0 0.0
    %725 = vmatpush1.xpose.msra.mxu0 0.0
    %726 = vmatprep.subr.mxu0 0.0
    %727 = vmatpush1.xpose.msra.mxu0 0.0
    %728 = vmatprep.mubr.f32.mxu0 0.0
    %729 = vmatmul.mubr.f32.gmra.mrb[0].mxu0 %v660
    %v730 = vpop.f32.mrb[0].mxu0
    %v731 = vadd.f32 0.0, %v730
    %v732 = vpop.f32.mrb[0].mxu0
    %733 = vdwg.mxu0
    %734 = vrot.lane.b32.xlu0 %v200, 96
    %v735 = vpop.permute.xlu0 %734
    %v736 = vsel %vm203, %v200, 0
    %v738 = vsel %vm203, %v735, 0
    %740 = vmatprep.subr.mxu0 0.0
    %741 = vmatpush1.xpose.msra.mxu0 %v738
    %742 = vmatprep.subr.mxu0 0.0
    %743 = vmatpush1.xpose.msra.mxu0 0.0
    %744 = vmatprep.subr.mxu0 0.0
    %745 = vmatpush1.xpose.msra.mxu0 0.0
    %746 = vmatprep.subr.mxu0 0.0
    %747 = vmatpush1.xpose.msra.mxu0 0.0
    %748 = vmatprep.subr.mxu0 0.0
    %749 = vmatpush1.xpose.msra.mxu0 0.0
    %750 = vmatprep.subr.mxu0 0.0
    %751 = vmatpush1.xpose.msra.mxu0 0.0
    %752 = vmatprep.subr.mxu0 0.0
    %753 = vmatpush1.xpose.msra.mxu0 0.0
    %754 = vmatprep.subr.mxu0 0.0
    %755 = vmatpush1.xpose.msra.mxu0 0.0
    %756 = vmatprep.subr.mxu0 0.0
    %757 = vmatpush1.xpose.msra.mxu0 0.0
    %758 = vmatprep.subr.mxu0 0.0
    %759 = vmatpush1.xpose.msra.mxu0 0.0
    %760 = vmatprep.subr.mxu0 0.0
    %761 = vmatpush1.xpose.msra.mxu0 0.0
    %762 = vmatprep.subr.mxu0 0.0
    %763 = vmatpush1.xpose.msra.mxu0 0.0
    %764 = vmatprep.subr.mxu0 0.0
    %765 = vmatpush1.xpose.msra.mxu0 0.0
    %766 = vmatprep.subr.mxu0 0.0
    %767 = vmatpush1.xpose.msra.mxu0 0.0
    %768 = vmatprep.subr.mxu0 0.0
    %769 = vmatpush1.xpose.msra.mxu0 0.0
    %770 = vmatprep.subr.mxu0 0.0
    %771 = vmatpush1.xpose.msra.mxu0 0.0
    %772 = vmatprep.subr.mxu0 0.0
    %773 = vmatpush1.xpose.msra.mxu0 0.0
    %774 = vmatprep.subr.mxu0 0.0
    %775 = vmatpush1.xpose.msra.mxu0 0.0
    %776 = vmatprep.subr.mxu0 0.0
    %777 = vmatpush1.xpose.msra.mxu0 0.0
    %778 = vmatprep.subr.mxu0 0.0
    %779 = vmatpush1.xpose.msra.mxu0 0.0
    %780 = vmatprep.subr.mxu0 0.0
    %781 = vmatpush1.xpose.msra.mxu0 0.0
    %782 = vmatprep.subr.mxu0 0.0
    %783 = vmatpush1.xpose.msra.mxu0 0.0
    %784 = vmatprep.subr.mxu0 0.0
    %785 = vmatpush1.xpose.msra.mxu0 0.0
    %786 = vmatprep.subr.mxu0 0.0
    %787 = vmatpush1.xpose.msra.mxu0 0.0
    %788 = vmatprep.subr.mxu0 0.0
    %789 = vmatpush1.xpose.msra.mxu0 0.0
    %790 = vmatprep.subr.mxu0 0.0
    %791 = vmatpush1.xpose.msra.mxu0 0.0
    %792 = vmatprep.subr.mxu0 0.0
    %793 = vmatpush1.xpose.msra.mxu0 0.0
    %794 = vmatprep.subr.mxu0 0.0
    %795 = vmatpush1.xpose.msra.mxu0 0.0
    %796 = vmatprep.subr.mxu0 0.0
    %797 = vmatpush1.xpose.msra.mxu0 0.0
    %798 = vmatprep.subr.mxu0 0.0
    %799 = vmatpush1.xpose.msra.mxu0 0.0
    %800 = vmatprep.subr.mxu0 0.0
    %801 = vmatpush1.xpose.msra.mxu0 0.0
    %802 = vmatprep.subr.mxu0 0.0
    %803 = vmatpush1.xpose.msra.mxu0 0.0
    %804 = vmatprep.mubr.f32.mxu0 0.0
    %805 = vmatmul.mubr.f32.gmra.mrb[0].mxu0 %v736
    %v806 = vpop.f32.mrb[0].mxu0
    %v807 = vadd.f32 0.0, %v806
    %v808 = vpop.f32.mrb[0].mxu0
    %809 = vdwg.mxu0
    %v810 = vmul.f32 %v275, 0.35355338
    %v811 = vmul.f32 %v351, 0.35355338
    %v812 = vmul.f32 %v427, 0.35355338
    %v813 = vmul.f32 %v503, 0.35355338
    %v814 = vmul.f32 %v579, 0.35355338
    %v815 = vmul.f32 %v655, 0.35355338
    %v816 = vmul.f32 %v731, 0.35355338
    %v817 = vmul.f32 %v807, 0.35355338
    %v818 = vld [vmem:[%s1] sm:$0x1]
    %v819 = vld [vmem:[%s1 + $0x1] sm:$0x1]
    %vm820 = vcmp.eq.f32.partialorder %v818, 0.0
    %vm821 = vcmp.eq.f32.partialorder %v819, 0.0
    %v822 = vsel %vm820, -1e+09, 0.0
    %v823 = vsel %vm821, -1e+09, 0.0
    %v826 = vlaneseq
    %v827 = vshrl.u32 %v826, 7
    %v828 = vsub.s32 0, %v827
    %v829 = vrot.slane %v822, %v828
    %v830 = vlaneseq
    %v831 = vshrl.u32 %v830, 7
    %v832 = vsub.s32 0, %v831
    %v833 = vrot.slane %v823, %v832
    %v836 = vadd.f32 %v810, %v829
    %v837 = vadd.f32 %v811, %v833
    %v838 = vadd.f32 %v812, %v829
    %v839 = vadd.f32 %v813, %v833
    %v840 = vadd.f32 %v814, %v829
    %v841 = vadd.f32 %v815, %v833
    %v842 = vadd.f32 %v816, %v829
    %v843 = vadd.f32 %v817, %v833
    %v844 = vsel %vm203, %v836, -inf
    %845 = vmax.xlane.f32.xlu0 %v844
    %v846 = vpop.xlane.xlu0 %845
    %v847 = vsel %vm203, %v837, -inf
    %848 = vmax.xlane.f32.xlu0 %v847
    %v849 = vpop.xlane.xlu0 %848
    %v850 = vsel %vm203, %v838, -inf
    %851 = vmax.xlane.f32.xlu0 %v850
    %v852 = vpop.xlane.xlu0 %851
    %v853 = vsel %vm203, %v839, -inf
    %854 = vmax.xlane.f32.xlu0 %v853
    %v855 = vpop.xlane.xlu0 %854
    %v856 = vsel %vm203, %v840, -inf
    %857 = vmax.xlane.f32.xlu0 %v856
    %v858 = vpop.xlane.xlu0 %857
    %v859 = vsel %vm203, %v841, -inf
    %860 = vmax.xlane.f32.xlu0 %v859
    %v861 = vpop.xlane.xlu0 %860
    %v862 = vsel %vm203, %v842, -inf
    %863 = vmax.xlane.f32.xlu0 %v862
    %v864 = vpop.xlane.xlu0 %863
    %v865 = vsel %vm203, %v843, -inf
    %866 = vmax.xlane.f32.xlu0 %v865
    %v867 = vpop.xlane.xlu0 %866
    %v868 = vsub.f32 %v836, %v846
    %v869 = vsub.f32 %v837, %v849
    %v870 = vsub.f32 %v838, %v852
    %v871 = vsub.f32 %v839, %v855
    %v872 = vsub.f32 %v840, %v858
    %v873 = vsub.f32 %v841, %v861
    %v874 = vsub.f32 %v842, %v864
    %v875 = vsub.f32 %v843, %v867
    %v876 = vmul.f32 %v868, 1.442695
    %v877 = vpow.pop %v876
    %v878 = vmul.f32 %v869, 1.442695
    %v879 = vpow.pop %v878
    %v880 = vmul.f32 %v870, 1.442695
    %v881 = vpow.pop %v880
    %v882 = vmul.f32 %v871, 1.442695
    %v883 = vpow.pop %v882
    %v884 = vmul.f32 %v872, 1.442695
    %v885 = vpow.pop %v884
    %v886 = vmul.f32 %v873, 1.442695
    %v887 = vpow.pop %v886
    %v888 = vmul.f32 %v874, 1.442695
    %v889 = vpow.pop %v888
    %v890 = vmul.f32 %v875, 1.442695
    %v891 = vpow.pop %v890
    %v892 = vsel %vm203, %v877, 0.0
    %893 = vadd.xlane.f32.xlu0 %v892
    %v894 = vpop.xlane.xlu0 %893
    %v895 = vsel %vm203, %v879, 0.0
    %896 = vadd.xlane.f32.xlu0 %v895
    %v897 = vpop.xlane.xlu0 %896
    %v898 = vsel %vm203, %v881, 0.0
    %899 = vadd.xlane.f32.xlu0 %v898
    %v900 = vpop.xlane.xlu0 %899
    %v901 = vsel %vm203, %v883, 0.0
    %902 = vadd.xlane.f32.xlu0 %v901
    %v903 = vpop.xlane.xlu0 %902
    %v904 = vsel %vm203, %v885, 0.0
    %905 = vadd.xlane.f32.xlu0 %v904
    %v906 = vpop.xlane.xlu0 %905
    %v907 = vsel %vm203, %v887, 0.0
    %908 = vadd.xlane.f32.xlu0 %v907
    %v909 = vpop.xlane.xlu0 %908
    %v910 = vsel %vm203, %v889, 0.0
    %911 = vadd.xlane.f32.xlu0 %v910
    %v912 = vpop.xlane.xlu0 %911
    %v913 = vsel %vm203, %v891, 0.0
    %914 = vadd.xlane.f32.xlu0 %v913
    %v915 = vpop.xlane.xlu0 %914
    %v916 = vrcp.pop %v894
    %v917 = vrcp.pop %v897
    %v918 = vrcp.pop %v900
    %v919 = vrcp.pop %v903
    %v920 = vrcp.pop %v906
    %v921 = vrcp.pop %v909
    %v922 = vrcp.pop %v912
    %v923 = vrcp.pop %v915
    %v924 = vmul.f32 %v877, %v916
    %v925 = vmul.f32 %v879, %v917
    %v926 = vmul.f32 %v881, %v918
    %v927 = vmul.f32 %v883, %v919
    %v928 = vmul.f32 %v885, %v920
    %v929 = vmul.f32 %v887, %v921
    %v930 = vmul.f32 %v889, %v922
    %v931 = vmul.f32 %v891, %v923
    %932 = vrot.lane.b32.xlu0 %v179, 64
    %v933 = vpop.permute.xlu0 %932
    %v936 = vsel %vm203, %v924, 0
    %938 = vmatprep.subr.mxu0 0.0
    %939 = vmatpush1.msra.mxu0 %v933
    %940 = vmatprep.subr.mxu0 0.0
    %941 = vmatpush1.msra.mxu0 0.0
    %942 = vmatprep.subr.mxu0 0.0
    %943 = vmatpush1.msra.mxu0 0.0
    %944 = vmatprep.subr.mxu0 0.0
    %945 = vmatpush1.msra.mxu0 0.0
    %946 = vmatprep.subr.mxu0 0.0
    %947 = vmatpush1.msra.mxu0 0.0
    %948 = vmatprep.subr.mxu0 0.0
    %949 = vmatpush1.msra.mxu0 0.0
    %950 = vmatprep.subr.mxu0 0.0
    %951 = vmatpush1.msra.mxu0 0.0
    %952 = vmatprep.subr.mxu0 0.0
    %953 = vmatpush1.msra.mxu0 0.0
    %954 = vmatprep.subr.mxu0 0.0
    %955 = vmatpush1.msra.mxu0 0.0
    %956 = vmatprep.subr.mxu0 0.0
    %957 = vmatpush1.msra.mxu0 0.0
    %958 = vmatprep.subr.mxu0 0.0
    %959 = vmatpush1.msra.mxu0 0.0
    %960 = vmatprep.subr.mxu0 0.0
    %961 = vmatpush1.msra.mxu0 0.0
    %962 = vmatprep.subr.mxu0 0.0
    %963 = vmatpush1.msra.mxu0 0.0
    %964 = vmatprep.subr.mxu0 0.0
    %965 = vmatpush1.msra.mxu0 0.0
    %966 = vmatprep.subr.mxu0 0.0
    %967 = vmatpush1.msra.mxu0 0.0
    %968 = vmatprep.subr.mxu0 0.0
    %969 = vmatpush1.msra.mxu0 0.0
    %970 = vmatprep.subr.mxu0 0.0
    %971 = vmatpush1.msra.mxu0 0.0
    %972 = vmatprep.subr.mxu0 0.0
    %973 = vmatpush1.msra.mxu0 0.0
    %974 = vmatprep.subr.mxu0 0.0
    %975 = vmatpush1.msra.mxu0 0.0
    %976 = vmatprep.subr.mxu0 0.0
    %977 = vmatpush1.msra.mxu0 0.0
    %978 = vmatprep.subr.mxu0 0.0
    %979 = vmatpush1.msra.mxu0 0.0
    %980 = vmatprep.subr.mxu0 0.0
    %981 = vmatpush1.msra.mxu0 0.0
    %982 = vmatprep.subr.mxu0 0.0
    %983 = vmatpush1.msra.mxu0 0.0
    %984 = vmatprep.subr.mxu0 0.0
    %985 = vmatpush1.msra.mxu0 0.0
    %986 = vmatprep.subr.mxu0 0.0
    %987 = vmatpush1.msra.mxu0 0.0
    %988 = vmatprep.subr.mxu0 0.0
    %989 = vmatpush1.msra.mxu0 0.0
    %990 = vmatprep.subr.mxu0 0.0
    %991 = vmatpush1.msra.mxu0 0.0
    %992 = vmatprep.subr.mxu0 0.0
    %993 = vmatpush1.msra.mxu0 0.0
    %994 = vmatprep.subr.mxu0 0.0
    %995 = vmatpush1.msra.mxu0 0.0
    %996 = vmatprep.subr.mxu0 0.0
    %997 = vmatpush1.msra.mxu0 0.0
    %998 = vmatprep.subr.mxu0 0.0
    %999 = vmatpush1.msra.mxu0 0.0
    %1000 = vmatprep.subr.mxu0 0.0
    %1001 = vmatpush1.msra.mxu0 0.0
    %1002 = vmatprep.mubr.f32.mxu0 0.0
    %1003 = vmatmul.mubr.f32.gmra.mrb[0].mxu0 %v936
    %v1004 = vpop.f32.mrb[0].mxu0
    %v1005 = vadd.f32 0.0, %v1004
    %v1006 = vpop.f32.mrb[0].mxu0
    %1007 = vdwg.mxu0
    %1008 = vrot.lane.b32.xlu0 %v184, 64
    %v1009 = vpop.permute.xlu0 %1008
    %v1012 = vsel %vm203, %v925, 0
    %1014 = vmatprep.subr.mxu0 0.0
    %1015 = vmatpush1.msra.mxu0 %v1009
    %1016 = vmatprep.subr.mxu0 0.0
    %1017 = vmatpush1.msra.mxu0 0.0
    %1018 = vmatprep.subr.mxu0 0.0
    %1019 = vmatpush1.msra.mxu0 0.0
    %1020 = vmatprep.subr.mxu0 0.0
    %1021 = vmatpush1.msra.mxu0 0.0
    %1022 = vmatprep.subr.mxu0 0.0
    %1023 = vmatpush1.msra.mxu0 0.0
    %1024 = vmatprep.subr.mxu0 0.0
    %1025 = vmatpush1.msra.mxu0 0.0
    %1026 = vmatprep.subr.mxu0 0.0
    %1027 = vmatpush1.msra.mxu0 0.0
    %1028 = vmatprep.subr.mxu0 0.0
    %1029 = vmatpush1.msra.mxu0 0.0
    %1030 = vmatprep.subr.mxu0 0.0
    %1031 = vmatpush1.msra.mxu0 0.0
    %1032 = vmatprep.subr.mxu0 0.0
    %1033 = vmatpush1.msra.mxu0 0.0
    %1034 = vmatprep.subr.mxu0 0.0
    %1035 = vmatpush1.msra.mxu0 0.0
    %1036 = vmatprep.subr.mxu0 0.0
    %1037 = vmatpush1.msra.mxu0 0.0
    %1038 = vmatprep.subr.mxu0 0.0
    %1039 = vmatpush1.msra.mxu0 0.0
    %1040 = vmatprep.subr.mxu0 0.0
    %1041 = vmatpush1.msra.mxu0 0.0
    %1042 = vmatprep.subr.mxu0 0.0
    %1043 = vmatpush1.msra.mxu0 0.0
    %1044 = vmatprep.subr.mxu0 0.0
    %1045 = vmatpush1.msra.mxu0 0.0
    %1046 = vmatprep.subr.mxu0 0.0
    %1047 = vmatpush1.msra.mxu0 0.0
    %1048 = vmatprep.subr.mxu0 0.0
    %1049 = vmatpush1.msra.mxu0 0.0
    %1050 = vmatprep.subr.mxu0 0.0
    %1051 = vmatpush1.msra.mxu0 0.0
    %1052 = vmatprep.subr.mxu0 0.0
    %1053 = vmatpush1.msra.mxu0 0.0
    %1054 = vmatprep.subr.mxu0 0.0
    %1055 = vmatpush1.msra.mxu0 0.0
    %1056 = vmatprep.subr.mxu0 0.0
    %1057 = vmatpush1.msra.mxu0 0.0
    %1058 = vmatprep.subr.mxu0 0.0
    %1059 = vmatpush1.msra.mxu0 0.0
    %1060 = vmatprep.subr.mxu0 0.0
    %1061 = vmatpush1.msra.mxu0 0.0
    %1062 = vmatprep.subr.mxu0 0.0
    %1063 = vmatpush1.msra.mxu0 0.0
    %1064 = vmatprep.subr.mxu0 0.0
    %1065 = vmatpush1.msra.mxu0 0.0
    %1066 = vmatprep.subr.mxu0 0.0
    %1067 = vmatpush1.msra.mxu0 0.0
    %1068 = vmatprep.subr.mxu0 0.0
    %1069 = vmatpush1.msra.mxu0 0.0
    %1070 = vmatprep.subr.mxu0 0.0
    %1071 = vmatpush1.msra.mxu0 0.0
    %1072 = vmatprep.subr.mxu0 0.0
    %1073 = vmatpush1.msra.mxu0 0.0
    %1074 = vmatprep.subr.mxu0 0.0
    %1075 = vmatpush1.msra.mxu0 0.0
    %1076 = vmatprep.subr.mxu0 0.0
    %1077 = vmatpush1.msra.mxu0 0.0
    %1078 = vmatprep.mubr.f32.mxu0 0.0
    %1079 = vmatmul.mubr.f32.gmra.mrb[0].mxu0 %v1012
    %v1080 = vpop.f32.mrb[0].mxu0
    %v1081 = vadd.f32 0.0, %v1080
    %v1082 = vpop.f32.mrb[0].mxu0
    %1083 = vdwg.mxu0
    %1084 = vrot.lane.b32.xlu0 %v190, 64
    %v1085 = vpop.permute.xlu0 %1084
    %v1088 = vsel %vm203, %v926, 0
    %1090 = vmatprep.subr.mxu0 0.0
    %1091 = vmatpush1.msra.mxu0 %v1085
    %1092 = vmatprep.subr.mxu0 0.0
    %1093 = vmatpush1.msra.mxu0 0.0
    %1094 = vmatprep.subr.mxu0 0.0
    %1095 = vmatpush1.msra.mxu0 0.0
    %1096 = vmatprep.subr.mxu0 0.0
    %1097 = vmatpush1.msra.mxu0 0.0
    %1098 = vmatprep.subr.mxu0 0.0
    %1099 = vmatpush1.msra.mxu0 0.0
    %1100 = vmatprep.subr.mxu0 0.0
    %1101 = vmatpush1.msra.mxu0 0.0
    %1102 = vmatprep.subr.mxu0 0.0
    %1103 = vmatpush1.msra.mxu0 0.0
    %1104 = vmatprep.subr.mxu0 0.0
    %1105 = vmatpush1.msra.mxu0 0.0
    %1106 = vmatprep.subr.mxu0 0.0
    %1107 = vmatpush1.msra.mxu0 0.0
    %1108 = vmatprep.subr.mxu0 0.0
    %1109 = vmatpush1.msra.mxu0 0.0
    %1110 = vmatprep.subr.mxu0 0.0
    %1111 = vmatpush1.msra.mxu0 0.0
    %1112 = vmatprep.subr.mxu0 0.0
    %1113 = vmatpush1.msra.mxu0 0.0
    %1114 = vmatprep.subr.mxu0 0.0
    %1115 = vmatpush1.msra.mxu0 0.0
    %1116 = vmatprep.subr.mxu0 0.0
    %1117 = vmatpush1.msra.mxu0 0.0
    %1118 = vmatprep.subr.mxu0 0.0
    %1119 = vmatpush1.msra.mxu0 0.0
    %1120 = vmatprep.subr.mxu0 0.0
    %1121 = vmatpush1.msra.mxu0 0.0
    %1122 = vmatprep.subr.mxu0 0.0
    %1123 = vmatpush1.msra.mxu0 0.0
    %1124 = vmatprep.subr.mxu0 0.0
    %1125 = vmatpush1.msra.mxu0 0.0
    %1126 = vmatprep.subr.mxu0 0.0
    %1127 = vmatpush1.msra.mxu0 0.0
    %1128 = vmatprep.subr.mxu0 0.0
    %1129 = vmatpush1.msra.mxu0 0.0
    %1130 = vmatprep.subr.mxu0 0.0
    %1131 = vmatpush1.msra.mxu0 0.0
    %1132 = vmatprep.subr.mxu0 0.0
    %1133 = vmatpush1.msra.mxu0 0.0
    %1134 = vmatprep.subr.mxu0 0.0
    %1135 = vmatpush1.msra.mxu0 0.0
    %1136 = vmatprep.subr.mxu0 0.0
    %1137 = vmatpush1.msra.mxu0 0.0
    %1138 = vmatprep.subr.mxu0 0.0
    %1139 = vmatpush1.msra.mxu0 0.0
    %1140 = vmatprep.subr.mxu0 0.0
    %1141 = vmatpush1.msra.mxu0 0.0
    %1142 = vmatprep.subr.mxu0 0.0
    %1143 = vmatpush1.msra.mxu0 0.0
    %1144 = vmatprep.subr.mxu0 0.0
    %1145 = vmatpush1.msra.mxu0 0.0
    %1146 = vmatprep.subr.mxu0 0.0
    %1147 = vmatpush1.msra.mxu0 0.0
    %1148 = vmatprep.subr.mxu0 0.0
    %1149 = vmatpush1.msra.mxu0 0.0
    %1150 = vmatprep.subr.mxu0 0.0
    %1151 = vmatpush1.msra.mxu0 0.0
    %1152 = vmatprep.subr.mxu0 0.0
    %1153 = vmatpush1.msra.mxu0 0.0
    %1154 = vmatprep.mubr.f32.mxu0 0.0
    %1155 = vmatmul.mubr.f32.gmra.mrb[0].mxu0 %v1088
    %v1156 = vpop.f32.mrb[0].mxu0
    %v1157 = vadd.f32 0.0, %v1156
    %v1158 = vpop.f32.mrb[0].mxu0
    %1159 = vdwg.mxu0
    %1160 = vrot.lane.b32.xlu0 %v192, 64
    %v1161 = vpop.permute.xlu0 %1160
    %v1164 = vsel %vm203, %v927, 0
    %1166 = vmatprep.subr.mxu0 0.0
    %1167 = vmatpush1.msra.mxu0 %v1161
    %1168 = vmatprep.subr.mxu0 0.0
    %1169 = vmatpush1.msra.mxu0 0.0
    %1170 = vmatprep.subr.mxu0 0.0
    %1171 = vmatpush1.msra.mxu0 0.0
    %1172 = vmatprep.subr.mxu0 0.0
    %1173 = vmatpush1.msra.mxu0 0.0
    %1174 = vmatprep.subr.mxu0 0.0
    %1175 = vmatpush1.msra.mxu0 0.0
    %1176 = vmatprep.subr.mxu0 0.0
    %1177 = vmatpush1.msra.mxu0 0.0
    %1178 = vmatprep.subr.mxu0 0.0
    %1179 = vmatpush1.msra.mxu0 0.0
    %1180 = vmatprep.subr.mxu0 0.0
    %1181 = vmatpush1.msra.mxu0 0.0
    %1182 = vmatprep.subr.mxu0 0.0
    %1183 = vmatpush1.msra.mxu0 0.0
    %1184 = vmatprep.subr.mxu0 0.0
    %1185 = vmatpush1.msra.mxu0 0.0
    %1186 = vmatprep.subr.mxu0 0.0
    %1187 = vmatpush1.msra.mxu0 0.0
    %1188 = vmatprep.subr.mxu0 0.0
    %1189 = vmatpush1.msra.mxu0 0.0
    %1190 = vmatprep.subr.mxu0 0.0
    %1191 = vmatpush1.msra.mxu0 0.0
    %1192 = vmatprep.subr.mxu0 0.0
    %1193 = vmatpush1.msra.mxu0 0.0
    %1194 = vmatprep.subr.mxu0 0.0
    %1195 = vmatpush1.msra.mxu0 0.0
    %1196 = vmatprep.subr.mxu0 0.0
    %1197 = vmatpush1.msra.mxu0 0.0
    %1198 = vmatprep.subr.mxu0 0.0
    %1199 = vmatpush1.msra.mxu0 0.0
    %1200 = vmatprep.subr.mxu0 0.0
    %1201 = vmatpush1.msra.mxu0 0.0
    %1202 = vmatprep.subr.mxu0 0.0
    %1203 = vmatpush1.msra.mxu0 0.0
    %1204 = vmatprep.subr.mxu0 0.0
    %1205 = vmatpush1.msra.mxu0 0.0
    %1206 = vmatprep.subr.mxu0 0.0
    %1207 = vmatpush1.msra.mxu0 0.0
    %1208 = vmatprep.subr.mxu0 0.0
    %1209 = vmatpush1.msra.mxu0 0.0
    %1210 = vmatprep.subr.mxu0 0.0
    %1211 = vmatpush1.msra.mxu0 0.0
    %1212 = vmatprep.subr.mxu0 0.0
    %1213 = vmatpush1.msra.mxu0 0.0
    %1214 = vmatprep.subr.mxu0 0.0
    %1215 = vmatpush1.msra.mxu0 0.0
    %1216 = vmatprep.subr.mxu0 0.0
    %1217 = vmatpush1.msra.mxu0 0.0
    %1218 = vmatprep.subr.mxu0 0.0
    %1219 = vmatpush1.msra.mxu0 0.0
    %1220 = vmatprep.subr.mxu0 0.0
    %1221 = vmatpush1.msra.mxu0 0.0
    %1222 = vmatprep.subr.mxu0 0.0
    %1223 = vmatpush1.msra.mxu0 0.0
    %1224 = vmatprep.subr.mxu0 0.0
    %1225 = vmatpush1.msra.mxu0 0.0
    %1226 = vmatprep.subr.mxu0 0.0
    %1227 = vmatpush1.msra.mxu0 0.0
    %1228 = vmatprep.subr.mxu0 0.0
    %1229 = vmatpush1.msra.mxu0 0.0
    %1230 = vmatprep.mubr.f32.mxu0 0.0
    %1231 = vmatmul.mubr.f32.gmra.mrb[0].mxu0 %v1164
    %v1232 = vpop.f32.mrb[0].mxu0
    %v1233 = vadd.f32 0.0, %v1232
    %v1234 = vpop.f32.mrb[0].mxu0
    %1235 = vdwg.mxu0
    %1236 = vrot.lane.b32.xlu0 %v194, 64
    %v1237 = vpop.permute.xlu0 %1236
    %v1240 = vsel %vm203, %v928, 0
    %1242 = vmatprep.subr.mxu0 0.0
    %1243 = vmatpush1.msra.mxu0 %v1237
    %1244 = vmatprep.subr.mxu0 0.0
    %1245 = vmatpush1.msra.mxu0 0.0
    %1246 = vmatprep.subr.mxu0 0.0
    %1247 = vmatpush1.msra.mxu0 0.0
    %1248 = vmatprep.subr.mxu0 0.0
    %1249 = vmatpush1.msra.mxu0 0.0
    %1250 = vmatprep.subr.mxu0 0.0
    %1251 = vmatpush1.msra.mxu0 0.0
    %1252 = vmatprep.subr.mxu0 0.0
    %1253 = vmatpush1.msra.mxu0 0.0
    %1254 = vmatprep.subr.mxu0 0.0
    %1255 = vmatpush1.msra.mxu0 0.0
    %1256 = vmatprep.subr.mxu0 0.0
    %1257 = vmatpush1.msra.mxu0 0.0
    %1258 = vmatprep.subr.mxu0 0.0
    %1259 = vmatpush1.msra.mxu0 0.0
    %1260 = vmatprep.subr.mxu0 0.0
    %1261 = vmatpush1.msra.mxu0 0.0
    %1262 = vmatprep.subr.mxu0 0.0
    %1263 = vmatpush1.msra.mxu0 0.0
    %1264 = vmatprep.subr.mxu0 0.0
    %1265 = vmatpush1.msra.mxu0 0.0
    %1266 = vmatprep.subr.mxu0 0.0
    %1267 = vmatpush1.msra.mxu0 0.0
    %1268 = vmatprep.subr.mxu0 0.0
    %1269 = vmatpush1.msra.mxu0 0.0
    %1270 = vmatprep.subr.mxu0 0.0
    %1271 = vmatpush1.msra.mxu0 0.0
    %1272 = vmatprep.subr.mxu0 0.0
    %1273 = vmatpush1.msra.mxu0 0.0
    %1274 = vmatprep.subr.mxu0 0.0
    %1275 = vmatpush1.msra.mxu0 0.0
    %1276 = vmatprep.subr.mxu0 0.0
    %1277 = vmatpush1.msra.mxu0 0.0
    %1278 = vmatprep.subr.mxu0 0.0
    %1279 = vmatpush1.msra.mxu0 0.0
    %1280 = vmatprep.subr.mxu0 0.0
    %1281 = vmatpush1.msra.mxu0 0.0
    %1282 = vmatprep.subr.mxu0 0.0
    %1283 = vmatpush1.msra.mxu0 0.0
    %1284 = vmatprep.subr.mxu0 0.0
    %1285 = vmatpush1.msra.mxu0 0.0
    %1286 = vmatprep.subr.mxu0 0.0
    %1287 = vmatpush1.msra.mxu0 0.0
    %1288 = vmatprep.subr.mxu0 0.0
    %1289 = vmatpush1.msra.mxu0 0.0
    %1290 = vmatprep.subr.mxu0 0.0
    %1291 = vmatpush1.msra.mxu0 0.0
    %1292 = vmatprep.subr.mxu0 0.0
    %1293 = vmatpush1.msra.mxu0 0.0
    %1294 = vmatprep.subr.mxu0 0.0
    %1295 = vmatpush1.msra.mxu0 0.0
    %1296 = vmatprep.subr.mxu0 0.0
    %1297 = vmatpush1.msra.mxu0 0.0
    %1298 = vmatprep.subr.mxu0 0.0
    %1299 = vmatpush1.msra.mxu0 0.0
    %1300 = vmatprep.subr.mxu0 0.0
    %1301 = vmatpush1.msra.mxu0 0.0
    %1302 = vmatprep.subr.mxu0 0.0
    %1303 = vmatpush1.msra.mxu0 0.0
    %1304 = vmatprep.subr.mxu0 0.0
    %1305 = vmatpush1.msra.mxu0 0.0
    %1306 = vmatprep.mubr.f32.mxu0 0.0
    %1307 = vmatmul.mubr.f32.gmra.mrb[0].mxu0 %v1240
    %v1308 = vpop.f32.mrb[0].mxu0
    %v1309 = vadd.f32 0.0, %v1308
    %v1310 = vpop.f32.mrb[0].mxu0
    %1311 = vdwg.mxu0
    %1312 = vrot.lane.b32.xlu0 %v196, 64
    %v1313 = vpop.permute.xlu0 %1312
    %v1316 = vsel %vm203, %v929, 0
    %1318 = vmatprep.subr.mxu0 0.0
    %1319 = vmatpush1.msra.mxu0 %v1313
    %1320 = vmatprep.subr.mxu0 0.0
    %1321 = vmatpush1.msra.mxu0 0.0
    %1322 = vmatprep.subr.mxu0 0.0
    %1323 = vmatpush1.msra.mxu0 0.0
    %1324 = vmatprep.subr.mxu0 0.0
    %1325 = vmatpush1.msra.mxu0 0.0
    %1326 = vmatprep.subr.mxu0 0.0
    %1327 = vmatpush1.msra.mxu0 0.0
    %1328 = vmatprep.subr.mxu0 0.0
    %1329 = vmatpush1.msra.mxu0 0.0
    %1330 = vmatprep.subr.mxu0 0.0
    %1331 = vmatpush1.msra.mxu0 0.0
    %1332 = vmatprep.subr.mxu0 0.0
    %1333 = vmatpush1.msra.mxu0 0.0
    %1334 = vmatprep.subr.mxu0 0.0
    %1335 = vmatpush1.msra.mxu0 0.0
    %1336 = vmatprep.subr.mxu0 0.0
    %1337 = vmatpush1.msra.mxu0 0.0
    %1338 = vmatprep.subr.mxu0 0.0
    %1339 = vmatpush1.msra.mxu0 0.0
    %1340 = vmatprep.subr.mxu0 0.0
    %1341 = vmatpush1.msra.mxu0 0.0
    %1342 = vmatprep.subr.mxu0 0.0
    %1343 = vmatpush1.msra.mxu0 0.0
    %1344 = vmatprep.subr.mxu0 0.0
    %1345 = vmatpush1.msra.mxu0 0.0
    %1346 = vmatprep.subr.mxu0 0.0
    %1347 = vmatpush1.msra.mxu0 0.0
    %1348 = vmatprep.subr.mxu0 0.0
    %1349 = vmatpush1.msra.mxu0 0.0
    %1350 = vmatprep.subr.mxu0 0.0
    %1351 = vmatpush1.msra.mxu0 0.0
    %1352 = vmatprep.subr.mxu0 0.0
    %1353 = vmatpush1.msra.mxu0 0.0
    %1354 = vmatprep.subr.mxu0 0.0
    %1355 = vmatpush1.msra.mxu0 0.0
    %1356 = vmatprep.subr.mxu0 0.0
    %1357 = vmatpush1.msra.mxu0 0.0
    %1358 = vmatprep.subr.mxu0 0.0
    %1359 = vmatpush1.msra.mxu0 0.0
    %1360 = vmatprep.subr.mxu0 0.0
    %1361 = vmatpush1.msra.mxu0 0.0
    %1362 = vmatprep.subr.mxu0 0.0
    %1363 = vmatpush1.msra.mxu0 0.0
    %1364 = vmatprep.subr.mxu0 0.0
    %1365 = vmatpush1.msra.mxu0 0.0
    %1366 = vmatprep.subr.mxu0 0.0
    %1367 = vmatpush1.msra.mxu0 0.0
    %1368 = vmatprep.subr.mxu0 0.0
    %1369 = vmatpush1.msra.mxu0 0.0
    %1370 = vmatprep.subr.mxu0 0.0
    %1371 = vmatpush1.msra.mxu0 0.0
    %1372 = vmatprep.subr.mxu0 0.0
    %1373 = vmatpush1.msra.mxu0 0.0
    %1374 = vmatprep.subr.mxu0 0.0
    %1375 = vmatpush1.msra.mxu0 0.0
    %1376 = vmatprep.subr.mxu0 0.0
    %1377 = vmatpush1.msra.mxu0 0.0
    %1378 = vmatprep.subr.mxu0 0.0
    %1379 = vmatpush1.msra.mxu0 0.0
    %1380 = vmatprep.subr.mxu0 0.0
    %1381 = vmatpush1.msra.mxu0 0.0
    %1382 = vmatprep.mubr.f32.mxu0 0.0
    %1383 = vmatmul.mubr.f32.gmra.mrb[0].mxu0 %v1316
    %v1384 = vpop.f32.mrb[0].mxu0
    %v1385 = vadd.f32 0.0, %v1384
    %v1386 = vpop.f32.mrb[0].mxu0
    %1387 = vdwg.mxu0
    %1388 = vrot.lane.b32.xlu0 %v198, 64
    %v1389 = vpop.permute.xlu0 %1388
    %v1392 = vsel %vm203, %v930, 0
    %1394 = vmatprep.subr.mxu0 0.0
    %1395 = vmatpush1.msra.mxu0 %v1389
    %1396 = vmatprep.subr.mxu0 0.0
    %1397 = vmatpush1.msra.mxu0 0.0
    %1398 = vmatprep.subr.mxu0 0.0
    %1399 = vmatpush1.msra.mxu0 0.0
    %1400 = vmatprep.subr.mxu0 0.0
    %1401 = vmatpush1.msra.mxu0 0.0
    %1402 = vmatprep.subr.mxu0 0.0
    %1403 = vmatpush1.msra.mxu0 0.0
    %1404 = vmatprep.subr.mxu0 0.0
    %1405 = vmatpush1.msra.mxu0 0.0
    %1406 = vmatprep.subr.mxu0 0.0
    %1407 = vmatpush1.msra.mxu0 0.0
    %1408 = vmatprep.subr.mxu0 0.0
    %1409 = vmatpush1.msra.mxu0 0.0
    %1410 = vmatprep.subr.mxu0 0.0
    %1411 = vmatpush1.msra.mxu0 0.0
    %1412 = vmatprep.subr.mxu0 0.0
    %1413 = vmatpush1.msra.mxu0 0.0
    %1414 = vmatprep.subr.mxu0 0.0
    %1415 = vmatpush1.msra.mxu0 0.0
    %1416 = vmatprep.subr.mxu0 0.0
    %1417 = vmatpush1.msra.mxu0 0.0
    %1418 = vmatprep.subr.mxu0 0.0
    %1419 = vmatpush1.msra.mxu0 0.0
    %1420 = vmatprep.subr.mxu0 0.0
    %1421 = vmatpush1.msra.mxu0 0.0
    %1422 = vmatprep.subr.mxu0 0.0
    %1423 = vmatpush1.msra.mxu0 0.0
    %1424 = vmatprep.subr.mxu0 0.0
    %1425 = vmatpush1.msra.mxu0 0.0
    %1426 = vmatprep.subr.mxu0 0.0
    %1427 = vmatpush1.msra.mxu0 0.0
    %1428 = vmatprep.subr.mxu0 0.0
    %1429 = vmatpush1.msra.mxu0 0.0
    %1430 = vmatprep.subr.mxu0 0.0
    %1431 = vmatpush1.msra.mxu0 0.0
    %1432 = vmatprep.subr.mxu0 0.0
    %1433 = vmatpush1.msra.mxu0 0.0
    %1434 = vmatprep.subr.mxu0 0.0
    %1435 = vmatpush1.msra.mxu0 0.0
    %1436 = vmatprep.subr.mxu0 0.0
    %1437 = vmatpush1.msra.mxu0 0.0
    %1438 = vmatprep.subr.mxu0 0.0
    %1439 = vmatpush1.msra.mxu0 0.0
    %1440 = vmatprep.subr.mxu0 0.0
    %1441 = vmatpush1.msra.mxu0 0.0
    %1442 = vmatprep.subr.mxu0 0.0
    %1443 = vmatpush1.msra.mxu0 0.0
    %1444 = vmatprep.subr.mxu0 0.0
    %1445 = vmatpush1.msra.mxu0 0.0
    %1446 = vmatprep.subr.mxu0 0.0
    %1447 = vmatpush1.msra.mxu0 0.0
    %1448 = vmatprep.subr.mxu0 0.0
    %1449 = vmatpush1.msra.mxu0 0.0
    %1450 = vmatprep.subr.mxu0 0.0
    %1451 = vmatpush1.msra.mxu0 0.0
    %1452 = vmatprep.subr.mxu0 0.0
    %1453 = vmatpush1.msra.mxu0 0.0
    %1454 = vmatprep.subr.mxu0 0.0
    %1455 = vmatpush1.msra.mxu0 0.0
    %1456 = vmatprep.subr.mxu0 0.0
    %1457 = vmatpush1.msra.mxu0 0.0
    %1458 = vmatprep.mubr.f32.mxu0 0.0
    %1459 = vmatmul.mubr.f32.gmra.mrb[0].mxu0 %v1392
    %v1460 = vpop.f32.mrb[0].mxu0
    %v1461 = vadd.f32 0.0, %v1460
    %v1462 = vpop.f32.mrb[0].mxu0
    %1463 = vdwg.mxu0
    %1464 = vrot.lane.b32.xlu0 %v200, 64
    %v1465 = vpop.permute.xlu0 %1464
    %v1468 = vsel %vm203, %v931, 0
    %1470 = vmatprep.subr.mxu0 0.0
    %1471 = vmatpush1.msra.mxu0 %v1465
    %1472 = vmatprep.subr.mxu0 0.0
    %1473 = vmatpush1.msra.mxu0 0.0
    %1474 = vmatprep.subr.mxu0 0.0
    %1475 = vmatpush1.msra.mxu0 0.0
    %1476 = vmatprep.subr.mxu0 0.0
    %1477 = vmatpush1.msra.mxu0 0.0
    %1478 = vmatprep.subr.mxu0 0.0
    %1479 = vmatpush1.msra.mxu0 0.0
    %1480 = vmatprep.subr.mxu0 0.0
    %1481 = vmatpush1.msra.mxu0 0.0
    %1482 = vmatprep.subr.mxu0 0.0
    %1483 = vmatpush1.msra.mxu0 0.0
    %1484 = vmatprep.subr.mxu0 0.0
    %1485 = vmatpush1.msra.mxu0 0.0
    %1486 = vmatprep.subr.mxu0 0.0
    %1487 = vmatpush1.msra.mxu0 0.0
    %1488 = vmatprep.subr.mxu0 0.0
    %1489 = vmatpush1.msra.mxu0 0.0
    %1490 = vmatprep.subr.mxu0 0.0
    %1491 = vmatpush1.msra.mxu0 0.0
    %1492 = vmatprep.subr.mxu0 0.0
    %1493 = vmatpush1.msra.mxu0 0.0
    %1494 = vmatprep.subr.mxu0 0.0
    %1495 = vmatpush1.msra.mxu0 0.0
    %1496 = vmatprep.subr.mxu0 0.0
    %1497 = vmatpush1.msra.mxu0 0.0
    %1498 = vmatprep.subr.mxu0 0.0
    %1499 = vmatpush1.msra.mxu0 0.0
    %1500 = vmatprep.subr.mxu0 0.0
    %1501 = vmatpush1.msra.mxu0 0.0
    %1502 = vmatprep.subr.mxu0 0.0
    %1503 = vmatpush1.msra.mxu0 0.0
    %1504 = vmatprep.subr.mxu0 0.0
    %1505 = vmatpush1.msra.mxu0 0.0
    %1506 = vmatprep.subr.mxu0 0.0
    %1507 = vmatpush1.msra.mxu0 0.0
    %1508 = vmatprep.subr.mxu0 0.0
    %1509 = vmatpush1.msra.mxu0 0.0
    %1510 = vmatprep.subr.mxu0 0.0
    %1511 = vmatpush1.msra.mxu0 0.0
    %1512 = vmatprep.subr.mxu0 0.0
    %1513 = vmatpush1.msra.mxu0 0.0
    %1514 = vmatprep.subr.mxu0 0.0
    %1515 = vmatpush1.msra.mxu0 0.0
    %1516 = vmatprep.subr.mxu0 0.0
    %1517 = vmatpush1.msra.mxu0 0.0
    %1518 = vmatprep.subr.mxu0 0.0
    %1519 = vmatpush1.msra.mxu0 0.0
    %1520 = vmatprep.subr.mxu0 0.0
    %1521 = vmatpush1.msra.mxu0 0.0
    %1522 = vmatprep.subr.mxu0 0.0
    %1523 = vmatpush1.msra.mxu0 0.0
    %1524 = vmatprep.subr.mxu0 0.0
    %1525 = vmatpush1.msra.mxu0 0.0
    %1526 = vmatprep.subr.mxu0 0.0
    %1527 = vmatpush1.msra.mxu0 0.0
    %1528 = vmatprep.subr.mxu0 0.0
    %1529 = vmatpush1.msra.mxu0 0.0
    %1530 = vmatprep.subr.mxu0 0.0
    %1531 = vmatpush1.msra.mxu0 0.0
    %1532 = vmatprep.subr.mxu0 0.0
    %1533 = vmatpush1.msra.mxu0 0.0
    %1534 = vmatprep.mubr.f32.mxu0 0.0
    %1535 = vmatmul.mubr.f32.gmra.mrb[0].mxu0 %v1468
    %v1536 = vpop.f32.mrb[0].mxu0
    %v1537 = vadd.f32 0.0, %v1536
    %v1538 = vpop.f32.mrb[0].mxu0
    %1539 = vdwg.mxu0
    %1542 = vrot.lane.b32.xlu0 %v1157, 8
    %v1543 = vpop.permute.xlu0 %1542
    %1544 = vrot.lane.b32.xlu0 %v1233, 8
    %v1545 = vpop.permute.xlu0 %1544
    %1550 = vrot.lane.b32.xlu0 %v1309, 16
    %v1551 = vpop.permute.xlu0 %1550
    %1552 = vrot.lane.b32.xlu0 %v1385, 16
    %v1553 = vpop.permute.xlu0 %1552
    %1558 = vrot.lane.b32.xlu0 %v1461, 24
    %v1559 = vpop.permute.xlu0 %1558
    %1560 = vrot.lane.b32.xlu0 %v1537, 24
    %v1561 = vpop.permute.xlu0 %1560
    %v1564 = vsel %vm203, %v1005, %v1543
    %v1565 = vsel %vm203, %v1081, %v1545
    %vm1566 = vcmask 130048
    %v1567 = vsel %vm1566, %v1564, %v1551
    %v1568 = vsel %vm1566, %v1565, %v1553
    %vm1569 = vcmask 195584
    %v1570 = vsel %vm1569, %v1567, %v1559
    %v1571 = vsel %vm1569, %v1568, %v1561
    %v1572 = vld [vmem:[%s3] sm:$0xff]
    %v1573 = vld [vmem:[%s3 + $0x8] sm:$0xff]
    %v1574 = vld [vmem:[%s3 + $0x10] sm:$0xff]
    %v1575 = vld [vmem:[%s3 + $0x18] sm:$0xff]
    %v1576 = vlaneseq
    %v1577 = vshrl.u32 %v1576, 7
    %v1578 = vsub.s32 2, %v1577
    %v1579 = vrot.slane %v43, %v1578
    %v1581 = vsel %vm44, %v1570, 0
    %v1584 = vsel %vm44, %v1571, 0
    %1586 = vmatprep.subr.mxu0 0.0
    %1587 = vmatpush1.msra.mxu0 %v1572
    %1588 = vmatprep.subr.mxu0 0.0
    %1589 = vmatpush1.msra.mxu0 %v1573
    %1590 = vmatprep.subr.mxu0 0.0
    %1591 = vmatpush1.msra.mxu0 %v1574
    %1592 = vmatprep.subr.mxu0 0.0
    %1593 = vmatpush1.msra.mxu0 %v1575
    %1594 = vmatprep.subr.mxu0 0.0
    %1595 = vmatpush1.msra.mxu0 0.0
    %1596 = vmatprep.subr.mxu0 0.0
    %1597 = vmatpush1.msra.mxu0 0.0
    %1598 = vmatprep.subr.mxu0 0.0
    %1599 = vmatpush1.msra.mxu0 0.0
    %1600 = vmatprep.subr.mxu0 0.0
    %1601 = vmatpush1.msra.mxu0 0.0
    %1602 = vmatprep.subr.mxu0 0.0
    %1603 = vmatpush1.msra.mxu0 0.0
    %1604 = vmatprep.subr.mxu0 0.0
    %1605 = vmatpush1.msra.mxu0 0.0
    %1606 = vmatprep.subr.mxu0 0.0
    %1607 = vmatpush1.msra.mxu0 0.0
    %1608 = vmatprep.subr.mxu0 0.0
    %1609 = vmatpush1.msra.mxu0 0.0
    %1610 = vmatprep.subr.mxu0 0.0
    %1611 = vmatpush1.msra.mxu0 0.0
    %1612 = vmatprep.subr.mxu0 0.0
    %1613 = vmatpush1.msra.mxu0 0.0
    %1614 = vmatprep.subr.mxu0 0.0
    %1615 = vmatpush1.msra.mxu0 0.0
    %1616 = vmatprep.subr.mxu0 0.0
    %1617 = vmatpush1.msra.mxu0 0.0
    %1618 = vmatprep.subr.mxu0 0.0
    %1619 = vmatpush1.msra.mxu0 0.0
    %1620 = vmatprep.subr.mxu0 0.0
    %1621 = vmatpush1.msra.mxu0 0.0
    %1622 = vmatprep.subr.mxu0 0.0
    %1623 = vmatpush1.msra.mxu0 0.0
    %1624 = vmatprep.subr.mxu0 0.0
    %1625 = vmatpush1.msra.mxu0 0.0
    %1626 = vmatprep.subr.mxu0 0.0
    %1627 = vmatpush1.msra.mxu0 0.0
    %1628 = vmatprep.subr.mxu0 0.0
    %1629 = vmatpush1.msra.mxu0 0.0
    %1630 = vmatprep.subr.mxu0 0.0
    %1631 = vmatpush1.msra.mxu0 0.0
    %1632 = vmatprep.subr.mxu0 0.0
    %1633 = vmatpush1.msra.mxu0 0.0
    %1634 = vmatprep.subr.mxu0 0.0
    %1635 = vmatpush1.msra.mxu0 0.0
    %1636 = vmatprep.subr.mxu0 0.0
    %1637 = vmatpush1.msra.mxu0 0.0
    %1638 = vmatprep.subr.mxu0 0.0
    %1639 = vmatpush1.msra.mxu0 0.0
    %1640 = vmatprep.subr.mxu0 0.0
    %1641 = vmatpush1.msra.mxu0 0.0
    %1642 = vmatprep.subr.mxu0 0.0
    %1643 = vmatpush1.msra.mxu0 0.0
    %1644 = vmatprep.subr.mxu0 0.0
    %1645 = vmatpush1.msra.mxu0 0.0
    %1646 = vmatprep.subr.mxu0 0.0
    %1647 = vmatpush1.msra.mxu0 0.0
    %1648 = vmatprep.subr.mxu0 0.0
    %1649 = vmatpush1.msra.mxu0 0.0
    %1650 = vmatprep.mubr.f32.mxu0 0.0
    %1651 = vmatmul.mubr.f32.gmra.mrb[0].mxu0 %v1581
    %v1652 = vpop.f32.mrb[0].mxu0
    %v1653 = vadd.f32 %v1579, %v1652
    %v1654 = vpop.f32.mrb[0].mxu0
    %1655 = vmatprep.mubr.f32.mxu0 0.0
    %1656 = vmatmul.mubr.f32.gmra.mrb[0].mxu0 %v1584
    %v1657 = vpop.f32.mrb[0].mxu0
    %v1658 = vadd.f32 %v1579, %v1657
    %v1659 = vpop.f32.mrb[0].mxu0
    %1660 = vdwg.mxu0
    %v1661 = vadd.f32 %v41, %v1653
    %v1662 = vadd.f32 %v42, %v1658
    %v1663 = vsel %vm44, %v1661, 0.0
    %1664 = vadd.xlane.f32.xlu0 %v1663
    %v1665 = vpop.xlane.xlu0 %1664
    %v1666 = vsel %vm44, %v1662, 0.0
    %1667 = vadd.xlane.f32.xlu0 %v1666
    %v1668 = vpop.xlane.xlu0 %1667
    %v1669 = vmul.f32 %v1665, %v51
    %v1670 = vmul.f32 %v1668, %v51
    %v1671 = vsub.f32 %v1661, %v1669
    %v1672 = vsub.f32 %v1662, %v1670
    %v1673 = vmul.f32 %v1671, %v1671
    %v1674 = vmul.f32 %v1672, %v1672
    %v1675 = vsel %vm44, %v1673, 0.0
    %1676 = vadd.xlane.f32.xlu0 %v1675
    %v1677 = vpop.xlane.xlu0 %1676
    %v1678 = vsel %vm44, %v1674, 0.0
    %1679 = vadd.xlane.f32.xlu0 %v1678
    %v1680 = vpop.xlane.xlu0 %1679
    %v1681 = vmul.f32 %v1677, 0.032258064
    %v1682 = vmul.f32 %v1680, 0.032258064
    %v1683 = vlaneseq
    %v1684 = vshrl.u32 %v1683, 7
    %v1685 = vsub.s32 5, %v1684
    %v1686 = vrot.slane %v43, %v1685
    %v1687 = vmul.f32 %v1686, %v1671
    %v1688 = vmul.f32 %v1686, %v1672
    %v1689 = vrsqrt.pop %v1681
    %v1690 = vmul.f32 %v1681, %v1689
    %vm1691 = vcmp.eq.f32.partialorder %v1681, inf
    %v1692 = vsel %vm1691, %v1681, %v1690
    %vm1693 = vcmp.eq.f32.partialorder %v1681, 0.0
    %v1694 = vand.u32 %v1681, 2147483648
    %v1695 = vsel %vm1693, %v1694, %v1692
    %v1696 = vrsqrt.pop %v1682
    %v1697 = vmul.f32 %v1682, %v1696
    %vm1698 = vcmp.eq.f32.partialorder %v1682, inf
    %v1699 = vsel %vm1698, %v1682, %v1697
    %vm1700 = vcmp.eq.f32.partialorder %v1682, 0.0
    %v1701 = vand.u32 %v1682, 2147483648
    %v1702 = vsel %vm1700, %v1701, %v1699
    %v1703 = vadd.f32 %v1695, 1e-06
    %v1704 = vadd.f32 %v1702, 1e-06
    %v1705 = vrcp.pop %v1703
    %v1706 = vmul.f32 %v1687, %v1705
    %v1707 = vrcp.pop %v1704
    %v1708 = vmul.f32 %v1688, %v1707
    %v1709 = vlaneseq
    %v1710 = vshrl.u32 %v1709, 7
    %v1711 = vsub.s32 6, %v1710
    %v1712 = vrot.slane %v43, %v1711
    %v1713 = vadd.f32 %v1706, %v1712
    %v1714 = vadd.f32 %v1708, %v1712
    %v1715 = vld [vmem:[%s4] sm:$0xff]
    %v1716 = vld [vmem:[%s4 + $0x8] sm:$0xff]
    %v1717 = vld [vmem:[%s4 + $0x10] sm:$0xff]
    %v1718 = vld [vmem:[%s4 + $0x18] sm:$0xff]
    %v1719 = vlaneseq
    %v1720 = vshrl.u32 %v1719, 7
    %v1721 = vsub.s32 1, %v1720
    %v1722 = vrot.slane %v43, %v1721
    %v1724 = vsel %vm44, %v1713, 0
    %v1727 = vsel %vm44, %v1714, 0
    %1729 = vmatprep.subr.mxu0 0.0
    %1730 = vmatpush1.msra.mxu0 %v1715
    %1731 = vmatprep.subr.mxu0 0.0
    %1732 = vmatpush1.msra.mxu0 %v1716
    %1733 = vmatprep.subr.mxu0 0.0
    %1734 = vmatpush1.msra.mxu0 %v1717
    %1735 = vmatprep.subr.mxu0 0.0
    %1736 = vmatpush1.msra.mxu0 %v1718
    %1737 = vmatprep.subr.mxu0 0.0
    %1738 = vmatpush1.msra.mxu0 0.0
    %1739 = vmatprep.subr.mxu0 0.0
    %1740 = vmatpush1.msra.mxu0 0.0
    %1741 = vmatprep.subr.mxu0 0.0
    %1742 = vmatpush1.msra.mxu0 0.0
    %1743 = vmatprep.subr.mxu0 0.0
    %1744 = vmatpush1.msra.mxu0 0.0
    %1745 = vmatprep.subr.mxu0 0.0
    %1746 = vmatpush1.msra.mxu0 0.0
    %1747 = vmatprep.subr.mxu0 0.0
    %1748 = vmatpush1.msra.mxu0 0.0
    %1749 = vmatprep.subr.mxu0 0.0
    %1750 = vmatpush1.msra.mxu0 0.0
    %1751 = vmatprep.subr.mxu0 0.0
    %1752 = vmatpush1.msra.mxu0 0.0
    %1753 = vmatprep.subr.mxu0 0.0
    %1754 = vmatpush1.msra.mxu0 0.0
    %1755 = vmatprep.subr.mxu0 0.0
    %1756 = vmatpush1.msra.mxu0 0.0
    %1757 = vmatprep.subr.mxu0 0.0
    %1758 = vmatpush1.msra.mxu0 0.0
    %1759 = vmatprep.subr.mxu0 0.0
    %1760 = vmatpush1.msra.mxu0 0.0
    %1761 = vmatprep.subr.mxu0 0.0
    %1762 = vmatpush1.msra.mxu0 0.0
    %1763 = vmatprep.subr.mxu0 0.0
    %1764 = vmatpush1.msra.mxu0 0.0
    %1765 = vmatprep.subr.mxu0 0.0
    %1766 = vmatpush1.msra.mxu0 0.0
    %1767 = vmatprep.subr.mxu0 0.0
    %1768 = vmatpush1.msra.mxu0 0.0
    %1769 = vmatprep.subr.mxu0 0.0
    %1770 = vmatpush1.msra.mxu0 0.0
    %1771 = vmatprep.subr.mxu0 0.0
    %1772 = vmatpush1.msra.mxu0 0.0
    %1773 = vmatprep.subr.mxu0 0.0
    %1774 = vmatpush1.msra.mxu0 0.0
    %1775 = vmatprep.subr.mxu0 0.0
    %1776 = vmatpush1.msra.mxu0 0.0
    %1777 = vmatprep.subr.mxu0 0.0
    %1778 = vmatpush1.msra.mxu0 0.0
    %1779 = vmatprep.subr.mxu0 0.0
    %1780 = vmatpush1.msra.mxu0 0.0
    %1781 = vmatprep.subr.mxu0 0.0
    %1782 = vmatpush1.msra.mxu0 0.0
    %1783 = vmatprep.subr.mxu0 0.0
    %1784 = vmatpush1.msra.mxu0 0.0
    %1785 = vmatprep.subr.mxu0 0.0
    %1786 = vmatpush1.msra.mxu0 0.0
    %1787 = vmatprep.subr.mxu0 0.0
    %1788 = vmatpush1.msra.mxu0 0.0
    %1789 = vmatprep.subr.mxu0 0.0
    %1790 = vmatpush1.msra.mxu0 0.0
    %1791 = vmatprep.subr.mxu0 0.0
    %1792 = vmatpush1.msra.mxu0 0.0
    %1793 = vmatprep.mubr.f32.mxu0 0.0
    %1794 = vmatmul.mubr.f32.gmra.mrb[0].mxu0 %v1724
    %v1795 = vpop.f32.mrb[0].mxu0
    %v1796 = vadd.f32 %v1722, %v1795
    %v1797 = vpop.f32.mrb[0].mxu0
    %1798 = vmatprep.mubr.f32.mxu0 0.0
    %1799 = vmatmul.mubr.f32.gmra.mrb[0].mxu0 %v1727
    %v1800 = vpop.f32.mrb[0].mxu0
    %v1801 = vadd.f32 %v1722, %v1800
    %v1802 = vpop.f32.mrb[0].mxu0
    %1803 = vdwg.mxu0
    %v1804 = vmax.f32 %v1796, 0.0
    %v1805 = vmax.f32 %v1801, 0.0
    %v1806 = vld [vmem:[%s5] sm:$0xff]
    %v1807 = vld [vmem:[%s5 + $0x8] sm:$0xff]
    %v1808 = vld [vmem:[%s5 + $0x10] sm:$0xff]
    %v1809 = vld [vmem:[%s5 + $0x18] sm:$0xff]
    %v1810 = vld [vmem:[%s5 + $0x20] sm:$0xff]
    %v1811 = vld [vmem:[%s5 + $0x28] sm:$0xff]
    %v1812 = vld [vmem:[%s5 + $0x30] sm:$0xff]
    %v1813 = vld [vmem:[%s5 + $0x38] sm:$0xff]
    %v1814 = vlaneseq
    %v1815 = vshrl.u32 %v1814, 7
    %v1816 = vsub.s32 7, %v1815
    %v1817 = vrot.slane %v43, %v1816
    %vm1818 = vcmask 523264
    %v1820 = vsel %vm1818, %v1804, 0
    %v1823 = vsel %vm1818, %v1805, 0
    %1825 = vmatprep.subr.mxu0 0.0
    %1826 = vmatpush1.msra.mxu0 %v1806
    %1827 = vmatprep.subr.mxu0 0.0
    %1828 = vmatpush1.msra.mxu0 %v1807
    %1829 = vmatprep.subr.mxu0 0.0
    %1830 = vmatpush1.msra.mxu0 %v1808
    %1831 = vmatprep.subr.mxu0 0.0
    %1832 = vmatpush1.msra.mxu0 %v1809
    %1833 = vmatprep.subr.mxu0 0.0
    %1834 = vmatpush1.msra.mxu0 %v1810
    %1835 = vmatprep.subr.mxu0 0.0
    %1836 = vmatpush1.msra.mxu0 %v1811
    %1837 = vmatprep.subr.mxu0 0.0
    %1838 = vmatpush1.msra.mxu0 %v1812
    %1839 = vmatprep.subr.mxu0 0.0
    %1840 = vmatpush1.msra.mxu0 %v1813
    %1841 = vmatprep.subr.mxu0 0.0
    %1842 = vmatpush1.msra.mxu0 0.0
    %1843 = vmatprep.subr.mxu0 0.0
    %1844 = vmatpush1.msra.mxu0 0.0
    %1845 = vmatprep.subr.mxu0 0.0
    %1846 = vmatpush1.msra.mxu0 0.0
    %1847 = vmatprep.subr.mxu0 0.0
    %1848 = vmatpush1.msra.mxu0 0.0
    %1849 = vmatprep.subr.mxu0 0.0
    %1850 = vmatpush1.msra.mxu0 0.0
    %1851 = vmatprep.subr.mxu0 0.0
    %1852 = vmatpush1.msra.mxu0 0.0
    %1853 = vmatprep.subr.mxu0 0.0
    %1854 = vmatpush1.msra.mxu0 0.0
    %1855 = vmatprep.subr.mxu0 0.0
    %1856 = vmatpush1.msra.mxu0 0.0
    %1857 = vmatprep.subr.mxu0 0.0
    %1858 = vmatpush1.msra.mxu0 0.0
    %1859 = vmatprep.subr.mxu0 0.0
    %1860 = vmatpush1.msra.mxu0 0.0
    %1861 = vmatprep.subr.mxu0 0.0
    %1862 = vmatpush1.msra.mxu0 0.0
    %1863 = vmatprep.subr.mxu0 0.0
    %1864 = vmatpush1.msra.mxu0 0.0
    %1865 = vmatprep.subr.mxu0 0.0
    %1866 = vmatpush1.msra.mxu0 0.0
    %1867 = vmatprep.subr.mxu0 0.0
    %1868 = vmatpush1.msra.mxu0 0.0
    %1869 = vmatprep.subr.mxu0 0.0
    %1870 = vmatpush1.msra.mxu0 0.0
    %1871 = vmatprep.subr.mxu0 0.0
    %1872 = vmatpush1.msra.mxu0 0.0
    %1873 = vmatprep.subr.mxu0 0.0
    %1874 = vmatpush1.msra.mxu0 0.0
    %1875 = vmatprep.subr.mxu0 0.0
    %1876 = vmatpush1.msra.mxu0 0.0
    %1877 = vmatprep.subr.mxu0 0.0
    %1878 = vmatpush1.msra.mxu0 0.0
    %1879 = vmatprep.subr.mxu0 0.0
    %1880 = vmatpush1.msra.mxu0 0.0
    %1881 = vmatprep.subr.mxu0 0.0
    %1882 = vmatpush1.msra.mxu0 0.0
    %1883 = vmatprep.subr.mxu0 0.0
    %1884 = vmatpush1.msra.mxu0 0.0
    %1885 = vmatprep.subr.mxu0 0.0
    %1886 = vmatpush1.msra.mxu0 0.0
    %1887 = vmatprep.subr.mxu0 0.0
    %1888 = vmatpush1.msra.mxu0 0.0
    %1889 = vmatprep.mubr.f32.mxu0 0.0
    %1890 = vmatmul.mubr.f32.gmra.mrb[0].mxu0 %v1820
    %v1891 = vpop.f32.mrb[0].mxu0
    %v1892 = vadd.f32 %v1817, %v1891
    %v1893 = vpop.f32.mrb[0].mxu0
    %1894 = vmatprep.mubr.f32.mxu0 0.0
    %1895 = vmatmul.mubr.f32.gmra.mrb[0].mxu0 %v1823
    %v1896 = vpop.f32.mrb[0].mxu0
    %v1897 = vadd.f32 %v1817, %v1896
    %v1898 = vpop.f32.mrb[0].mxu0
    %1899 = vdwg.mxu0
    %v1900 = vadd.f32 %v1661, %v1892
    %v1901 = vadd.f32 %v1662, %v1897
    %1902 = vst.msk [vmem:[#allocation5] sm:$0xff] %vm44, %v1900
    %1903 = vst.msk [vmem:[#allocation5 + $0x8] sm:$0xff] %vm44, %v1901
    // Predicated region
    $region34: #{tpu_custom_call.1} parent=1 // pred_check
      _
    $region35: #{tpu_custom_call.1} parent=1 // pred_check_branch
      %1905 = sbr.rel (0) target = $region37
    $region36: #{tpu_custom_call.1} parent=1 // pred_region
      %s1907 = ssub.s32 256, 256
      %1908 = vsyncadd [#allocation4], %s1907
      %s1909 = sshll.u32 [#allocation5], 4
      %s1910 = int_to_ptr.vmem [resolvable:$true] %s1909
      %1915 = dma.vmem_to_hbm [thread:$0]  %s1910, 256, %s7, [#allocation4], 128, 128, 8
    $region37: #{tpu_custom_call.1} parent=1 // pred_fallthru
      _
    // Predicated region
    $region38: #{tpu_custom_call.1} parent=1 // pred_check
      _
    $region39: #{tpu_custom_call.1} parent=1 // pred_check_branch
      %1917 = sbr.rel (0) target = $region41
    $region40: #{tpu_custom_call.1} parent=1 // pred_region
      %1918 = dma.done [#allocation4], 256
    $region41: #{tpu_custom_call.1} parent=1 // pred_fallthru
      _
    %1919 = vsyncpa [#allocation3], 1
    %1920 = vsyncpa [#allocation4], 1

</llo_original>
